<compile_context>
chip_gen: v7x
topology: tpu7x:2x2x1
jax: 0.10.0
libtpu: 0.0.40
codegen_flags: <defaults>
</compile_context>

<pallas_src>
import functools

import numpy as np
import jax
import jax.numpy as jnp
from jax.experimental import pallas as pl
from jax.experimental.pallas import tpu as pltpu


# ----------------------------------------------------------------------------
# helpers
# ----------------------------------------------------------------------------

def _full_spec(shape):
    """BlockSpec covering the whole (small) array as a single VMEM block."""
    nd = len(shape)
    return pl.BlockSpec(shape, lambda i, _nd=nd: (0,) * _nd)


def _mosaic_params(*dims):
    """dimension_semantics compiler params, tolerant of jax version differences."""
    cls = getattr(pltpu, "CompilerParams", None) or getattr(pltpu, "TPUCompilerParams", None)
    if cls is None:
        return None
    try:
        return cls(dimension_semantics=tuple(dims))
    except TypeError:
        return None


# ----------------------------------------------------------------------------
# Kernel 1: fused conv (im2col matmul) + bias + ReLU + 2x2 max-pool
# ----------------------------------------------------------------------------

def _conv_relu_pool_kernel(pa_ref, pb_ref, pc_ref, pd_ref, w_ref, b_ref, o_ref):
    # Each p*_ref block is (1, Hp*Wp, 9*Cin): im2col patches at one of the four
    # 2x2 pooling window positions.  conv+bias+ReLU for each position, then
    # elementwise max over the four -> pooled output, all in VMEM.
    w = w_ref[...]
    b = b_ref[...]

    def branch(p_ref):
        y = jnp.dot(p_ref[0], w, preferred_element_type=jnp.float32) + b
        return jnp.maximum(y, 0.0)

    pooled = jnp.maximum(jnp.maximum(branch(pa_ref), branch(pb_ref)),
                         jnp.maximum(branch(pc_ref), branch(pd_ref)))
    o_ref[0] = pooled


def conv_relu_pool(x_nhwc, w_oihw, bias):
    """Valid 3x3 conv + ReLU + 2x2 max-pool (floor), fused in one Pallas kernel.

    x: (N, H, W, Cin) f32; w: (Cout, Cin, 3, 3); bias: (Cout,).
    Returns (N, Hp, Wp, Cout) f32 with Hp = (H-2)//2, Wp = (W-2)//2.
    """
    N, H, W, Cin = x_nhwc.shape
    Cout = w_oihw.shape[0]
    Ho, Wo = H - 2, W - 2
    Hp, Wp = Ho // 2, Wo // 2
    K = 9 * Cin
    M2 = Hp * Wp

    # ---- XLA glue: im2col + select the 4 pooling-window positions ----
    cols = [x_nhwc[:, ky:ky + Ho, kx:kx + Wo, :] for ky in range(3) for kx in range(3)]
    patches = jnp.concatenate(cols, axis=-1)                 # (N, Ho, Wo, 9*Cin)

    def sel(dy, dx):
        return patches[:, dy:2 * Hp + dy:2, dx:2 * Wp + dx:2, :].reshape(N, M2, K)

    pa, pb, pc, pd = sel(0, 0), sel(0, 1), sel(1, 0), sel(1, 1)

    # weight (Cout,Cin,3,3) -> (ky,kx,Cin,Cout) -> (9*Cin, Cout); matches im2col order
    w2 = jnp.transpose(w_oihw, (2, 3, 1, 0)).reshape(K, Cout)
    b2 = bias.reshape(1, Cout)

    patch_spec = pl.BlockSpec((1, M2, K), lambda n: (n, 0, 0))
    out = pl.pallas_call(
        _conv_relu_pool_kernel,
        out_shape=jax.ShapeDtypeStruct((N, M2, Cout), jnp.float32),
        grid=(N,),
        in_specs=[patch_spec, patch_spec, patch_spec, patch_spec,
                  pl.BlockSpec((K, Cout), lambda n: (0, 0)),
                  pl.BlockSpec((1, Cout), lambda n: (0, 0))],
        out_specs=pl.BlockSpec((1, M2, Cout), lambda n: (n, 0, 0)),
        compiler_params=_mosaic_params("parallel"),
    )(pa, pb, pc, pd, w2, b2)
    return out.reshape(N, Hp, Wp, Cout)


# ----------------------------------------------------------------------------
# Kernel 2: fused head = image_fc1 + tabular MLP + (split-weight) final linear
#           + ReLU + softmax
# ----------------------------------------------------------------------------

def _head_kernel(*refs, n_tab):
    x_ref, w1_ref, b1_ref, t_ref = refs[0], refs[1], refs[2], refs[3]
    tab_refs = refs[4:4 + 2 * n_tab]
    hwi_ref, hwt_ref, hb_ref = refs[4 + 2 * n_tab:7 + 2 * n_tab]
    logits_ref, probas_ref = refs[7 + 2 * n_tab], refs[8 + 2 * n_tab]

    # image_fc1 + ReLU (fc1 weight rows pre-permuted so HWC-flat input matches
    # torch's NCHW flatten semantics).
    img = jnp.dot(x_ref[...], w1_ref[...], preferred_element_type=jnp.float32) + b1_ref[...]
    img = jnp.maximum(img, 0.0)

    # tabular MLP: Linear -> ReLU chained fully in-kernel.
    t = t_ref[...]
    for j in range(n_tab):
        tw = tab_refs[2 * j][...]
        tb = tab_refs[2 * j + 1][...]
        t = jnp.maximum(jnp.dot(t, tw, preferred_element_type=jnp.float32) + tb, 0.0)

    # final linear with the weight split by rows (img part / tab part) so no
    # concat of the two feature vectors is ever materialized.
    y = (jnp.dot(img, hwi_ref[...], preferred_element_type=jnp.float32)
         + jnp.dot(t, hwt_ref[...], preferred_element_type=jnp.float32)
         + hb_ref[...])
    logits = jnp.maximum(y, 0.0)
    logits_ref[...] = logits

    # row-wise softmax (exact division to keep rows summing to 1 tightly).
    m = jnp.max(logits, axis=-1, keepdims=True)
    e = jnp.exp(logits - m)
    s = jnp.sum(e, axis=-1, keepdims=True)
    probas_ref[...] = e / s


def fused_head(x_img_flat, image_fc1, tab, tab_fcs, head):
    w1, b1 = image_fc1
    hwi, hwt, hb = head
    n_tab = len(tab_fcs)
    N = x_img_flat.shape[0]
    num_classes = hb.shape[1]

    ins = [x_img_flat, w1, b1, tab]
    for (tw, tb) in tab_fcs:
        ins += [tw, tb]
    ins += [hwi, hwt, hb]

    out_sds = (jax.ShapeDtypeStruct((N, num_classes), jnp.float32),
               jax.ShapeDtypeStruct((N, num_classes), jnp.float32))
    logits, probas = pl.pallas_call(
        functools.partial(_head_kernel, n_tab=n_tab),
        out_shape=out_sds,
        grid=(1,),
        in_specs=[_full_spec(a.shape) for a in ins],
        out_specs=(_full_spec((N, num_classes)), _full_spec((N, num_classes))),
    )(*ins)
    return logits, probas


# ----------------------------------------------------------------------------
# Model: parameters + forward
# ----------------------------------------------------------------------------

CFG = dict(
    num_conv_layers=2,
    num_filters=[4, 8],
    kernel_size=3,
    final_neurons=16,
    total_tabular_input_features=8,
    num_tabular_fc_layers=2,
    tabular_fc_neurons_list=[12, 16],
    num_classes=5,
    input_image_x_size=16,
    input_image_y_size=16,
)


def init_params(key, cfg):
    keys = iter(jax.random.split(key, 64))

    def dense(kin, kout):
        kw, kb = jax.random.split(next(keys))
        s = 1.0 / float(np.sqrt(kin))
        w = jax.random.uniform(kw, (kin, kout), jnp.float32, -s, s)
        b = jax.random.uniform(kb, (1, kout), jnp.float32, -s, s)
        return w, b

    params = {}

    # conv stack
    convs = []
    in_c = 3
    out_h, out_w = cfg["input_image_x_size"], cfg["input_image_y_size"]
    for i in range(cfg["num_conv_layers"]):
        out_c = int(cfg["num_filters"][i])
        kw, kb = jax.random.split(next(keys))
        fan_in = in_c * cfg["kernel_size"] * cfg["kernel_size"]
        s = 1.0 / float(np.sqrt(fan_in))
        w = jax.random.uniform(kw, (out_c, in_c, 3, 3), jnp.float32, -s, s)
        b = jax.random.uniform(kb, (out_c,), jnp.float32, -s, s)
        convs.append((w, b))
        out_h = (out_h - cfg["kernel_size"] + 1) // 2
        out_w = (out_w - cfg["kernel_size"] + 1) // 2
        in_c = out_c
    params["convs"] = convs

    conv_out_feature = in_c * out_h * out_w  # static python int; NOT stored in params

    # image_fc1: build in torch's (C,H,W)-flatten row order, then fold the
    # NCHW->NHWC flatten permutation into the weight rows.
    w1_chw, b1 = dense(conv_out_feature, cfg["final_neurons"])
    C, Hc, Wc = in_c, out_h, out_w
    perm = np.array([c * (Hc * Wc) + h * Wc + w_
                     for h in range(Hc) for w_ in range(Wc) for c in range(C)],
                    dtype=np.int32)
    w1_hwc = w1_chw[perm, :]
    params["image_fc1"] = (w1_hwc, b1)        # used by the Pallas forward (HWC flatten)
    params["image_fc1_chw"] = (w1_chw, b1)    # used only by the pure-JAX reference

    # tabular MLP
    tab_layers = []
    tab_in = cfg["total_tabular_input_features"]
    for j in range(cfg["num_tabular_fc_layers"]):
        tab_out = cfg["tabular_fc_neurons_list"][j]
        if j == cfg["num_tabular_fc_layers"] - 1:
            tab_layers.append(dense(tab_in, cfg["final_neurons"]))
        else:
            tab_layers.append(dense(tab_in, tab_out))
        tab_in = tab_out
    params["tab_fcs"] = tab_layers

    # head: split the (2*final_neurons, num_classes) weight by rows so the
    # kernel never needs a concat of [img_feat, tab_feat].
    w_head, b_head = dense(cfg["final_neurons"] * 2, cfg["num_classes"])
    params["head"] = (w_head[:cfg["final_neurons"], :],
                      w_head[cfg["final_neurons"]:, :],
                      b_head)
    return params


def forward(params, img_nchw, tab):
    """img_nchw: (N, 3, H, W) float32; tab: (N, total_tabular_input_features)."""
    x = jnp.transpose(img_nchw, (0, 2, 3, 1))           # NCHW -> NHWC (layout glue)
    for (w, b) in params["convs"]:
        x = conv_relu_pool(x, w, b)                      # fused conv+bias+ReLU+pool kernel
    N = x.shape[0]
    x_flat = x.reshape(N, -1)                            # HWC flatten; fc1 rows pre-permuted
    t = tab.astype(jnp.float32)
    logits, probas = fused_head(x_flat, params["image_fc1"], t,
                                params["tab_fcs"], params["head"])
    return logits, probas


# ----------------------------------------------------------------------------
# pure-JAX reference (for correctness check only)
# ----------------------------------------------------------------------------

def reference_forward(params, img_nchw, tab):
    x = img_nchw
    for (w, b) in params["convs"]:
        x = jax.lax.conv_general_dilated(
            x, w, window_strides=(1, 1), padding="VALID",
            dimension_numbers=("NCHW", "OIHW", "NCHW"))
        x = jnp.maximum(x + b.reshape(1, -1, 1, 1), 0.0)
        x = jax.lax.reduce_window(x, -jnp.inf, jax.lax.max,
                                  (1, 1, 2, 2), (1, 1, 2, 2), "VALID")
    N = x.shape[0]
    x_flat = x.reshape(N, -1)                            # torch-style NCHW flatten
    w1, b1 = params["image_fc1_chw"]
    img_feat = jnp.maximum(x_flat @ w1 + b1, 0.0)

    t = tab.astype(jnp.float32)
    for (tw, tb) in params["tab_fcs"]:
        t = jnp.maximum(t @ tw + tb, 0.0)

    hwi, hwt, hb = params["head"]
    w_full = jnp.concatenate([hwi, hwt], axis=0)
    combined = jnp.concatenate([img_feat, t], axis=1)
    logits = jnp.maximum(combined @ w_full + hb, 0.0)
    probas = jax.nn.softmax(logits, axis=1)
    return logits, probas


# ----------------------------------------------------------------------------
if __name__ == "__main__":
    key = jax.random.PRNGKey(0)
    k_params, k_img, k_tab = jax.random.split(key, 3)

    params = init_params(k_params, CFG)

    batch = 2
    img = jax.random.normal(
        k_img, (batch, 3, CFG["input_image_x_size"], CFG["input_image_y_size"]),
        dtype=jnp.float32)
    tab = jax.random.normal(
        k_tab, (batch, CFG["total_tabular_input_features"]), dtype=jnp.float32)

    logits, probas = jax.jit(forward)(params, img, tab)
    jax.block_until_ready((logits, probas))

    assert logits.shape == (batch, CFG["num_classes"])
    assert probas.shape == (batch, CFG["num_classes"])
    # softmax rows must sum to ~1
    assert jnp.allclose(jnp.sum(probas, axis=1), 1.0, atol=1e-5)

    # check against a pure-JAX reference of the same module
    ref_logits, ref_probas = reference_forward(params, img, tab)
    assert jnp.allclose(logits, ref_logits, atol=1e-4, rtol=1e-4)
    assert jnp.allclose(probas, ref_probas, atol=1e-4, rtol=1e-4)

    print("KERNEL_OK")
</pallas_src>

<mosaic_0001>
module attributes {stable_mosaic.version = 11 : i64} {
  func.func @_conv_relu_pool_kernel(%arg0: i32, %arg1: memref<1x49x27xf32, #tpu.memory_space<vmem>>, %arg2: memref<1x49x27xf32, #tpu.memory_space<vmem>>, %arg3: memref<1x49x27xf32, #tpu.memory_space<vmem>>, %arg4: memref<1x49x27xf32, #tpu.memory_space<vmem>>, %arg5: memref<27x4xf32, #tpu.memory_space<vmem>>, %arg6: memref<1x4xf32, #tpu.memory_space<vmem>>, %arg7: memref<1x49x4xf32, #tpu.memory_space<vmem>>) attributes {dimension_semantics = [#tpu.dimension_semantics<parallel>], iteration_bounds = array<i64: 2>, scalar_prefetch = 0 : i64, scratch_operands = 0 : i64, tpu.core_type = #tpu.core_type<tc>, window_params = [{transform_indices = @transform_0, window_bounds = array<i64: 1, 49, 27>}, {transform_indices = @transform_1, window_bounds = array<i64: 1, 49, 27>}, {transform_indices = @transform_2, window_bounds = array<i64: 1, 49, 27>}, {transform_indices = @transform_3, window_bounds = array<i64: 1, 49, 27>}, {pipeline_mode = #tpu.pipeline_mode<synchronous>, transform_indices = @transform_4, window_bounds = array<i64: 27, 4>}, {pipeline_mode = #tpu.pipeline_mode<synchronous>, transform_indices = @transform_5, window_bounds = array<i64: 1, 4>}, {transform_indices = @transform_6, window_bounds = array<i64: 1, 49, 4>}]} {
    %c0 = arith.constant 0 : index
    %c0_0 = arith.constant 0 : index
    %0 = vector.load %arg5[%c0, %c0_0] : memref<27x4xf32, #tpu.memory_space<vmem>>, vector<27x4xf32>
    %c0_1 = arith.constant 0 : index
    %c0_2 = arith.constant 0 : index
    %1 = vector.load %arg6[%c0_1, %c0_2] : memref<1x4xf32, #tpu.memory_space<vmem>>, vector<1x4xf32>
    %c0_3 = arith.constant 0 : index
    %c0_4 = arith.constant 0 : index
    %c0_5 = arith.constant 0 : index
    %2 = vector.load %arg1[%c0_3, %c0_4, %c0_5] : memref<1x49x27xf32, #tpu.memory_space<vmem>>, vector<1x49x27xf32>
    %3 = vector.shape_cast %2 : vector<1x49x27xf32> to vector<49x27xf32>
    %cst = arith.constant dense<0.000000e+00> : vector<49x4xf32>
    %4 = tpu.matmul %3, %0, %cst {dimension_numbers = #tpu.dot_dimension_numbers<[1], [0], [0], [1], [0, 0, 1, 1], [], []>} : vector<49x27xf32>, vector<27x4xf32>, vector<49x4xf32> -> vector<49x4xf32>
    %5 = vector.broadcast %1 : vector<1x4xf32> to vector<49x4xf32>
    %6 = arith.addf %4, %5 : vector<49x4xf32>
    %cst_6 = arith.constant 0.000000e+00 : f32
    %7 = vector.broadcast %cst_6 : f32 to vector<49x4xf32>
    %8 = arith.maximumf %6, %7 : vector<49x4xf32>
    %c0_7 = arith.constant 0 : index
    %c0_8 = arith.constant 0 : index
    %c0_9 = arith.constant 0 : index
    %9 = vector.load %arg2[%c0_7, %c0_8, %c0_9] : memref<1x49x27xf32, #tpu.memory_space<vmem>>, vector<1x49x27xf32>
    %10 = vector.shape_cast %9 : vector<1x49x27xf32> to vector<49x27xf32>
    %cst_10 = arith.constant dense<0.000000e+00> : vector<49x4xf32>
    %11 = tpu.matmul %10, %0, %cst_10 {dimension_numbers = #tpu.dot_dimension_numbers<[1], [0], [0], [1], [0, 0, 1, 1], [], []>} : vector<49x27xf32>, vector<27x4xf32>, vector<49x4xf32> -> vector<49x4xf32>
    %12 = vector.broadcast %1 : vector<1x4xf32> to vector<49x4xf32>
    %13 = arith.addf %11, %12 : vector<49x4xf32>
    %cst_11 = arith.constant 0.000000e+00 : f32
    %14 = vector.broadcast %cst_11 : f32 to vector<49x4xf32>
    %15 = arith.maximumf %13, %14 : vector<49x4xf32>
    %16 = arith.maximumf %8, %15 : vector<49x4xf32>
    %c0_12 = arith.constant 0 : index
    %c0_13 = arith.constant 0 : index
    %c0_14 = arith.constant 0 : index
    %17 = vector.load %arg3[%c0_12, %c0_13, %c0_14] : memref<1x49x27xf32, #tpu.memory_space<vmem>>, vector<1x49x27xf32>
    %18 = vector.shape_cast %17 : vector<1x49x27xf32> to vector<49x27xf32>
    %cst_15 = arith.constant dense<0.000000e+00> : vector<49x4xf32>
    %19 = tpu.matmul %18, %0, %cst_15 {dimension_numbers = #tpu.dot_dimension_numbers<[1], [0], [0], [1], [0, 0, 1, 1], [], []>} : vector<49x27xf32>, vector<27x4xf32>, vector<49x4xf32> -> vector<49x4xf32>
    %20 = vector.broadcast %1 : vector<1x4xf32> to vector<49x4xf32>
    %21 = arith.addf %19, %20 : vector<49x4xf32>
    %cst_16 = arith.constant 0.000000e+00 : f32
    %22 = vector.broadcast %cst_16 : f32 to vector<49x4xf32>
    %23 = arith.maximumf %21, %22 : vector<49x4xf32>
    %c0_17 = arith.constant 0 : index
    %c0_18 = arith.constant 0 : index
    %c0_19 = arith.constant 0 : index
    %24 = vector.load %arg4[%c0_17, %c0_18, %c0_19] : memref<1x49x27xf32, #tpu.memory_space<vmem>>, vector<1x49x27xf32>
    %25 = vector.shape_cast %24 : vector<1x49x27xf32> to vector<49x27xf32>
    %cst_20 = arith.constant dense<0.000000e+00> : vector<49x4xf32>
    %26 = tpu.matmul %25, %0, %cst_20 {dimension_numbers = #tpu.dot_dimension_numbers<[1], [0], [0], [1], [0, 0, 1, 1], [], []>} : vector<49x27xf32>, vector<27x4xf32>, vector<49x4xf32> -> vector<49x4xf32>
    %27 = vector.broadcast %1 : vector<1x4xf32> to vector<49x4xf32>
    %28 = arith.addf %26, %27 : vector<49x4xf32>
    %cst_21 = arith.constant 0.000000e+00 : f32
    %29 = vector.broadcast %cst_21 : f32 to vector<49x4xf32>
    %30 = arith.maximumf %28, %29 : vector<49x4xf32>
    %31 = arith.maximumf %23, %30 : vector<49x4xf32>
    %32 = arith.maximumf %16, %31 : vector<49x4xf32>
    %c0_22 = arith.constant 0 : index
    %c0_23 = arith.constant 0 : index
    %c0_24 = arith.constant 0 : index
    %33 = vector.load %arg7[%c0_22, %c0_23, %c0_24] : memref<1x49x4xf32, #tpu.memory_space<vmem>>, vector<1x49x4xf32>
    %34 = vector.shape_cast %33 : vector<1x49x4xf32> to vector<49x4xf32>
    %35 = vector.shape_cast %32 : vector<49x4xf32> to vector<1x49x4xf32>
    tpu.vector_store %arg7[%c0_22, %c0_23, %c0_24], %35 {strides = array<i32>} : memref<1x49x4xf32, #tpu.memory_space<vmem>>, vector<1x49x4xf32>,
    return
  }
  func.func @transform_0(%arg0: i32) -> (i32, i32, i32) {
    %c0_i32 = arith.constant 0 : i32
    %c0_i32_0 = arith.constant 0 : i32
    %c0_i32_1 = arith.constant 0 : i32
    return %arg0, %c0_i32, %c0_i32_0 : i32, i32, i32
  }
  func.func @transform_1(%arg0: i32) -> (i32, i32, i32) {
    %c0_i32 = arith.constant 0 : i32
    %c0_i32_0 = arith.constant 0 : i32
    %c0_i32_1 = arith.constant 0 : i32
    return %arg0, %c0_i32, %c0_i32_0 : i32, i32, i32
  }
  func.func @transform_2(%arg0: i32) -> (i32, i32, i32) {
    %c0_i32 = arith.constant 0 : i32
    %c0_i32_0 = arith.constant 0 : i32
    %c0_i32_1 = arith.constant 0 : i32
    return %arg0, %c0_i32, %c0_i32_0 : i32, i32, i32
  }
  func.func @transform_3(%arg0: i32) -> (i32, i32, i32) {
    %c0_i32 = arith.constant 0 : i32
    %c0_i32_0 = arith.constant 0 : i32
    %c0_i32_1 = arith.constant 0 : i32
    return %arg0, %c0_i32, %c0_i32_0 : i32, i32, i32
  }
  func.func @transform_4(%arg0: i32) -> (i32, i32) {
    %c0_i32 = arith.constant 0 : i32
    %c0_i32_0 = arith.constant 0 : i32
    %c0_i32_1 = arith.constant 0 : i32
    return %c0_i32, %c0_i32_0 : i32, i32
  }
  func.func @transform_5(%arg0: i32) -> (i32, i32) {
    %c0_i32 = arith.constant 0 : i32
    %c0_i32_0 = arith.constant 0 : i32
    %c0_i32_1 = arith.constant 0 : i32
    return %c0_i32, %c0_i32_0 : i32, i32
  }
  func.func @transform_6(%arg0: i32) -> (i32, i32, i32) {
    %c0_i32 = arith.constant 0 : i32
    %c0_i32_0 = arith.constant 0 : i32
    %c0_i32_1 = arith.constant 0 : i32
    return %arg0, %c0_i32, %c0_i32_0 : i32, i32, i32
  }
}

module attributes {stable_mosaic.version = 11 : i64} {
  func.func @_conv_relu_pool_kernel(%arg0: i32, %arg1: memref<1x4x36xf32, #tpu.memory_space<vmem>>, %arg2: memref<1x4x36xf32, #tpu.memory_space<vmem>>, %arg3: memref<1x4x36xf32, #tpu.memory_space<vmem>>, %arg4: memref<1x4x36xf32, #tpu.memory_space<vmem>>, %arg5: memref<36x8xf32, #tpu.memory_space<vmem>>, %arg6: memref<1x8xf32, #tpu.memory_space<vmem>>, %arg7: memref<1x4x8xf32, #tpu.memory_space<vmem>>) attributes {dimension_semantics = [#tpu.dimension_semantics<parallel>], iteration_bounds = array<i64: 2>, scalar_prefetch = 0 : i64, scratch_operands = 0 : i64, tpu.core_type = #tpu.core_type<tc>, window_params = [{transform_indices = @transform_0, window_bounds = array<i64: 1, 4, 36>}, {transform_indices = @transform_1, window_bounds = array<i64: 1, 4, 36>}, {transform_indices = @transform_2, window_bounds = array<i64: 1, 4, 36>}, {transform_indices = @transform_3, window_bounds = array<i64: 1, 4, 36>}, {pipeline_mode = #tpu.pipeline_mode<synchronous>, transform_indices = @transform_4, window_bounds = array<i64: 36, 8>}, {pipeline_mode = #tpu.pipeline_mode<synchronous>, transform_indices = @transform_5, window_bounds = array<i64: 1, 8>}, {transform_indices = @transform_6, window_bounds = array<i64: 1, 4, 8>}]} {
    %c0 = arith.constant 0 : index
    %c0_0 = arith.constant 0 : index
    %0 = vector.load %arg5[%c0, %c0_0] : memref<36x8xf32, #tpu.memory_space<vmem>>, vector<36x8xf32>
    %c0_1 = arith.constant 0 : index
    %c0_2 = arith.constant 0 : index
    %1 = vector.load %arg6[%c0_1, %c0_2] : memref<1x8xf32, #tpu.memory_space<vmem>>, vector<1x8xf32>
    %c0_3 = arith.constant 0 : index
    %c0_4 = arith.constant 0 : index
    %c0_5 = arith.constant 0 : index
    %2 = vector.load %arg1[%c0_3, %c0_4, %c0_5] : memref<1x4x36xf32, #tpu.memory_space<vmem>>, vector<1x4x36xf32>
    %3 = vector.shape_cast %2 : vector<1x4x36xf32> to vector<4x36xf32>
    %cst = arith.constant dense<0.000000e+00> : vector<4x8xf32>
    %4 = tpu.matmul %3, %0, %cst {dimension_numbers = #tpu.dot_dimension_numbers<[1], [0], [0], [1], [0, 0, 1, 1], [], []>} : vector<4x36xf32>, vector<36x8xf32>, vector<4x8xf32> -> vector<4x8xf32>
    %5 = vector.broadcast %1 : vector<1x8xf32> to vector<4x8xf32>
    %6 = arith.addf %4, %5 : vector<4x8xf32>
    %cst_6 = arith.constant 0.000000e+00 : f32
    %7 = vector.broadcast %cst_6 : f32 to vector<4x8xf32>
    %8 = arith.maximumf %6, %7 : vector<4x8xf32>
    %c0_7 = arith.constant 0 : index
    %c0_8 = arith.constant 0 : index
    %c0_9 = arith.constant 0 : index
    %9 = vector.load %arg2[%c0_7, %c0_8, %c0_9] : memref<1x4x36xf32, #tpu.memory_space<vmem>>, vector<1x4x36xf32>
    %10 = vector.shape_cast %9 : vector<1x4x36xf32> to vector<4x36xf32>
    %cst_10 = arith.constant dense<0.000000e+00> : vector<4x8xf32>
    %11 = tpu.matmul %10, %0, %cst_10 {dimension_numbers = #tpu.dot_dimension_numbers<[1], [0], [0], [1], [0, 0, 1, 1], [], []>} : vector<4x36xf32>, vector<36x8xf32>, vector<4x8xf32> -> vector<4x8xf32>
    %12 = vector.broadcast %1 : vector<1x8xf32> to vector<4x8xf32>
    %13 = arith.addf %11, %12 : vector<4x8xf32>
    %cst_11 = arith.constant 0.000000e+00 : f32
    %14 = vector.broadcast %cst_11 : f32 to vector<4x8xf32>
    %15 = arith.maximumf %13, %14 : vector<4x8xf32>
    %16 = arith.maximumf %8, %15 : vector<4x8xf32>
    %c0_12 = arith.constant 0 : index
    %c0_13 = arith.constant 0 : index
    %c0_14 = arith.constant 0 : index
    %17 = vector.load %arg3[%c0_12, %c0_13, %c0_14] : memref<1x4x36xf32, #tpu.memory_space<vmem>>, vector<1x4x36xf32>
    %18 = vector.shape_cast %17 : vector<1x4x36xf32> to vector<4x36xf32>
    %cst_15 = arith.constant dense<0.000000e+00> : vector<4x8xf32>
    %19 = tpu.matmul %18, %0, %cst_15 {dimension_numbers = #tpu.dot_dimension_numbers<[1], [0], [0], [1], [0, 0, 1, 1], [], []>} : vector<4x36xf32>, vector<36x8xf32>, vector<4x8xf32> -> vector<4x8xf32>
    %20 = vector.broadcast %1 : vector<1x8xf32> to vector<4x8xf32>
    %21 = arith.addf %19, %20 : vector<4x8xf32>
    %cst_16 = arith.constant 0.000000e+00 : f32
    %22 = vector.broadcast %cst_16 : f32 to vector<4x8xf32>
    %23 = arith.maximumf %21, %22 : vector<4x8xf32>
    %c0_17 = arith.constant 0 : index
    %c0_18 = arith.constant 0 : index
    %c0_19 = arith.constant 0 : index
    %24 = vector.load %arg4[%c0_17, %c0_18, %c0_19] : memref<1x4x36xf32, #tpu.memory_space<vmem>>, vector<1x4x36xf32>
    %25 = vector.shape_cast %24 : vector<1x4x36xf32> to vector<4x36xf32>
    %cst_20 = arith.constant dense<0.000000e+00> : vector<4x8xf32>
    %26 = tpu.matmul %25, %0, %cst_20 {dimension_numbers = #tpu.dot_dimension_numbers<[1], [0], [0], [1], [0, 0, 1, 1], [], []>} : vector<4x36xf32>, vector<36x8xf32>, vector<4x8xf32> -> vector<4x8xf32>
    %27 = vector.broadcast %1 : vector<1x8xf32> to vector<4x8xf32>
    %28 = arith.addf %26, %27 : vector<4x8xf32>
    %cst_21 = arith.constant 0.000000e+00 : f32
    %29 = vector.broadcast %cst_21 : f32 to vector<4x8xf32>
    %30 = arith.maximumf %28, %29 : vector<4x8xf32>
    %31 = arith.maximumf %23, %30 : vector<4x8xf32>
    %32 = arith.maximumf %16, %31 : vector<4x8xf32>
    %c0_22 = arith.constant 0 : index
    %c0_23 = arith.constant 0 : index
    %c0_24 = arith.constant 0 : index
    %33 = vector.load %arg7[%c0_22, %c0_23, %c0_24] : memref<1x4x8xf32, #tpu.memory_space<vmem>>, vector<1x4x8xf32>
    %34 = vector.shape_cast %33 : vector<1x4x8xf32> to vector<4x8xf32>
    %35 = vector.shape_cast %32 : vector<4x8xf32> to vector<1x4x8xf32>
    tpu.vector_store %arg7[%c0_22, %c0_23, %c0_24], %35 {strides = array<i32>} : memref<1x4x8xf32, #tpu.memory_space<vmem>>, vector<1x4x8xf32>,
    return
  }
  func.func @transform_0(%arg0: i32) -> (i32, i32, i32) {
    %c0_i32 = arith.constant 0 : i32
    %c0_i32_0 = arith.constant 0 : i32
    %c0_i32_1 = arith.constant 0 : i32
    return %arg0, %c0_i32, %c0_i32_0 : i32, i32, i32
  }
  func.func @transform_1(%arg0: i32) -> (i32, i32, i32) {
    %c0_i32 = arith.constant 0 : i32
    %c0_i32_0 = arith.constant 0 : i32
    %c0_i32_1 = arith.constant 0 : i32
    return %arg0, %c0_i32, %c0_i32_0 : i32, i32, i32
  }
  func.func @transform_2(%arg0: i32) -> (i32, i32, i32) {
    %c0_i32 = arith.constant 0 : i32
    %c0_i32_0 = arith.constant 0 : i32
    %c0_i32_1 = arith.constant 0 : i32
    return %arg0, %c0_i32, %c0_i32_0 : i32, i32, i32
  }
  func.func @transform_3(%arg0: i32) -> (i32, i32, i32) {
    %c0_i32 = arith.constant 0 : i32
    %c0_i32_0 = arith.constant 0 : i32
    %c0_i32_1 = arith.constant 0 : i32
    return %arg0, %c0_i32, %c0_i32_0 : i32, i32, i32
  }
  func.func @transform_4(%arg0: i32) -> (i32, i32) {
    %c0_i32 = arith.constant 0 : i32
    %c0_i32_0 = arith.constant 0 : i32
    %c0_i32_1 = arith.constant 0 : i32
    return %c0_i32, %c0_i32_0 : i32, i32
  }
  func.func @transform_5(%arg0: i32) -> (i32, i32) {
    %c0_i32 = arith.constant 0 : i32
    %c0_i32_0 = arith.constant 0 : i32
    %c0_i32_1 = arith.constant 0 : i32
    return %c0_i32, %c0_i32_0 : i32, i32
  }
  func.func @transform_6(%arg0: i32) -> (i32, i32, i32) {
    %c0_i32 = arith.constant 0 : i32
    %c0_i32_0 = arith.constant 0 : i32
    %c0_i32_1 = arith.constant 0 : i32
    return %arg0, %c0_i32, %c0_i32_0 : i32, i32, i32
  }
}

module attributes {stable_mosaic.version = 11 : i64} {
  func.func @_head_kernel(%arg0: i32, %arg1: memref<2x32xf32, #tpu.memory_space<vmem>>, %arg2: memref<32x16xf32, #tpu.memory_space<vmem>>, %arg3: memref<1x16xf32, #tpu.memory_space<vmem>>, %arg4: memref<2x8xf32, #tpu.memory_space<vmem>>, %arg5: memref<8x12xf32, #tpu.memory_space<vmem>>, %arg6: memref<1x12xf32, #tpu.memory_space<vmem>>, %arg7: memref<12x16xf32, #tpu.memory_space<vmem>>, %arg8: memref<1x16xf32, #tpu.memory_space<vmem>>, %arg9: memref<16x5xf32, #tpu.memory_space<vmem>>, %arg10: memref<16x5xf32, #tpu.memory_space<vmem>>, %arg11: memref<1x5xf32, #tpu.memory_space<vmem>>, %arg12: memref<2x5xf32, #tpu.memory_space<vmem>>, %arg13: memref<2x5xf32, #tpu.memory_space<vmem>>) attributes {dimension_semantics = [#tpu.dimension_semantics<arbitrary>], iteration_bounds = array<i64: 1>, scalar_prefetch = 0 : i64, scratch_operands = 0 : i64, tpu.core_type = #tpu.core_type<tc>, window_params = [{pipeline_mode = #tpu.pipeline_mode<synchronous>, transform_indices = @transform_0, window_bounds = array<i64: 2, 32>}, {pipeline_mode = #tpu.pipeline_mode<synchronous>, transform_indices = @transform_1, window_bounds = array<i64: 32, 16>}, {pipeline_mode = #tpu.pipeline_mode<synchronous>, transform_indices = @transform_2, window_bounds = array<i64: 1, 16>}, {pipeline_mode = #tpu.pipeline_mode<synchronous>, transform_indices = @transform_3, window_bounds = array<i64: 2, 8>}, {pipeline_mode = #tpu.pipeline_mode<synchronous>, transform_indices = @transform_4, window_bounds = array<i64: 8, 12>}, {pipeline_mode = #tpu.pipeline_mode<synchronous>, transform_indices = @transform_5, window_bounds = array<i64: 1, 12>}, {pipeline_mode = #tpu.pipeline_mode<synchronous>, transform_indices = @transform_6, window_bounds = array<i64: 12, 16>}, {pipeline_mode = #tpu.pipeline_mode<synchronous>, transform_indices = @transform_7, window_bounds = array<i64: 1, 16>}, {pipeline_mode = #tpu.pipeline_mode<synchronous>, transform_indices = @transform_8, window_bounds = array<i64: 16, 5>}, {pipeline_mode = #tpu.pipeline_mode<synchronous>, transform_indices = @transform_9, window_bounds = array<i64: 16, 5>}, {pipeline_mode = #tpu.pipeline_mode<synchronous>, transform_indices = @transform_10, window_bounds = array<i64: 1, 5>}, {pipeline_mode = #tpu.pipeline_mode<synchronous>, transform_indices = @transform_11, window_bounds = array<i64: 2, 5>}, {pipeline_mode = #tpu.pipeline_mode<synchronous>, transform_indices = @transform_12, window_bounds = array<i64: 2, 5>}]} {
    %c0 = arith.constant 0 : index
    %c0_0 = arith.constant 0 : index
    %0 = vector.load %arg1[%c0, %c0_0] : memref<2x32xf32, #tpu.memory_space<vmem>>, vector<2x32xf32>
    %c0_1 = arith.constant 0 : index
    %c0_2 = arith.constant 0 : index
    %1 = vector.load %arg2[%c0_1, %c0_2] : memref<32x16xf32, #tpu.memory_space<vmem>>, vector<32x16xf32>
    %cst = arith.constant dense<0.000000e+00> : vector<2x16xf32>
    %2 = tpu.matmul %0, %1, %cst {dimension_numbers = #tpu.dot_dimension_numbers<[1], [0], [0], [1], [0, 0, 1, 1], [], []>} : vector<2x32xf32>, vector<32x16xf32>, vector<2x16xf32> -> vector<2x16xf32>
    %c0_3 = arith.constant 0 : index
    %c0_4 = arith.constant 0 : index
    %3 = vector.load %arg3[%c0_3, %c0_4] : memref<1x16xf32, #tpu.memory_space<vmem>>, vector<1x16xf32>
    %4 = vector.broadcast %3 : vector<1x16xf32> to vector<2x16xf32>
    %5 = arith.addf %2, %4 : vector<2x16xf32>
    %cst_5 = arith.constant 0.000000e+00 : f32
    %6 = vector.broadcast %cst_5 : f32 to vector<2x16xf32>
    %7 = arith.maximumf %5, %6 : vector<2x16xf32>
    %c0_6 = arith.constant 0 : index
    %c0_7 = arith.constant 0 : index
    %8 = vector.load %arg4[%c0_6, %c0_7] : memref<2x8xf32, #tpu.memory_space<vmem>>, vector<2x8xf32>
    %c0_8 = arith.constant 0 : index
    %c0_9 = arith.constant 0 : index
    %9 = vector.load %arg5[%c0_8, %c0_9] : memref<8x12xf32, #tpu.memory_space<vmem>>, vector<8x12xf32>
    %c0_10 = arith.constant 0 : index
    %c0_11 = arith.constant 0 : index
    %10 = vector.load %arg6[%c0_10, %c0_11] : memref<1x12xf32, #tpu.memory_space<vmem>>, vector<1x12xf32>
    %cst_12 = arith.constant dense<0.000000e+00> : vector<2x12xf32>
    %11 = tpu.matmul %8, %9, %cst_12 {dimension_numbers = #tpu.dot_dimension_numbers<[1], [0], [0], [1], [0, 0, 1, 1], [], []>} : vector<2x8xf32>, vector<8x12xf32>, vector<2x12xf32> -> vector<2x12xf32>
    %12 = vector.broadcast %10 : vector<1x12xf32> to vector<2x12xf32>
    %13 = arith.addf %11, %12 : vector<2x12xf32>
    %cst_13 = arith.constant 0.000000e+00 : f32
    %14 = vector.broadcast %cst_13 : f32 to vector<2x12xf32>
    %15 = arith.maximumf %13, %14 : vector<2x12xf32>
    %c0_14 = arith.constant 0 : index
    %c0_15 = arith.constant 0 : index
    %16 = vector.load %arg7[%c0_14, %c0_15] : memref<12x16xf32, #tpu.memory_space<vmem>>, vector<12x16xf32>
    %c0_16 = arith.constant 0 : index
    %c0_17 = arith.constant 0 : index
    %17 = vector.load %arg8[%c0_16, %c0_17] : memref<1x16xf32, #tpu.memory_space<vmem>>, vector<1x16xf32>
    %cst_18 = arith.constant dense<0.000000e+00> : vector<2x16xf32>
    %18 = tpu.matmul %15, %16, %cst_18 {dimension_numbers = #tpu.dot_dimension_numbers<[1], [0], [0], [1], [0, 0, 1, 1], [], []>} : vector<2x12xf32>, vector<12x16xf32>, vector<2x16xf32> -> vector<2x16xf32>
    %19 = vector.broadcast %17 : vector<1x16xf32> to vector<2x16xf32>
    %20 = arith.addf %18, %19 : vector<2x16xf32>
    %cst_19 = arith.constant 0.000000e+00 : f32
    %21 = vector.broadcast %cst_19 : f32 to vector<2x16xf32>
    %22 = arith.maximumf %20, %21 : vector<2x16xf32>
    %c0_20 = arith.constant 0 : index
    %c0_21 = arith.constant 0 : index
    %23 = vector.load %arg9[%c0_20, %c0_21] : memref<16x5xf32, #tpu.memory_space<vmem>>, vector<16x5xf32>
    %cst_22 = arith.constant dense<0.000000e+00> : vector<2x5xf32>
    %24 = tpu.matmul %7, %23, %cst_22 {dimension_numbers = #tpu.dot_dimension_numbers<[1], [0], [0], [1], [0, 0, 1, 1], [], []>} : vector<2x16xf32>, vector<16x5xf32>, vector<2x5xf32> -> vector<2x5xf32>
    %c0_23 = arith.constant 0 : index
    %c0_24 = arith.constant 0 : index
    %25 = vector.load %arg10[%c0_23, %c0_24] : memref<16x5xf32, #tpu.memory_space<vmem>>, vector<16x5xf32>
    %cst_25 = arith.constant dense<0.000000e+00> : vector<2x5xf32>
    %26 = tpu.matmul %22, %25, %cst_25 {dimension_numbers = #tpu.dot_dimension_numbers<[1], [0], [0], [1], [0, 0, 1, 1], [], []>} : vector<2x16xf32>, vector<16x5xf32>, vector<2x5xf32> -> vector<2x5xf32>
    %27 = arith.addf %24, %26 : vector<2x5xf32>
    %c0_26 = arith.constant 0 : index
    %c0_27 = arith.constant 0 : index
    %28 = vector.load %arg11[%c0_26, %c0_27] : memref<1x5xf32, #tpu.memory_space<vmem>>, vector<1x5xf32>
    %29 = vector.broadcast %28 : vector<1x5xf32> to vector<2x5xf32>
    %30 = arith.addf %27, %29 : vector<2x5xf32>
    %cst_28 = arith.constant 0.000000e+00 : f32
    %31 = vector.broadcast %cst_28 : f32 to vector<2x5xf32>
    %32 = arith.maximumf %30, %31 : vector<2x5xf32>
    %c0_29 = arith.constant 0 : index
    %c0_30 = arith.constant 0 : index
    %33 = vector.load %arg12[%c0_29, %c0_30] : memref<2x5xf32, #tpu.memory_space<vmem>>, vector<2x5xf32>
    tpu.vector_store %arg12[%c0_29, %c0_30], %32 {strides = array<i32>} : memref<2x5xf32, #tpu.memory_space<vmem>>, vector<2x5xf32>,
    %cst_31 = arith.constant dense<0xFF800000> : vector<2xf32>
    %34 = vector.multi_reduction <maximumf>, %32, %cst_31 [1] : vector<2x5xf32> to vector<2xf32>
    %35 = vector.shape_cast %34 : vector<2xf32> to vector<2x1xf32>
    %36 = vector.broadcast %35 : vector<2x1xf32> to vector<2x5xf32>
    %37 = arith.subf %32, %36 : vector<2x5xf32>
    %38 = math.exp %37 : vector<2x5xf32>
    %cst_32 = arith.constant dense<0.000000e+00> : vector<2xf32>
    %39 = vector.multi_reduction <add>, %38, %cst_32 [1] : vector<2x5xf32> to vector<2xf32>
    %40 = vector.shape_cast %39 : vector<2xf32> to vector<2x1xf32>
    %41 = vector.broadcast %40 : vector<2x1xf32> to vector<2x5xf32>
    %42 = arith.divf %38, %41 : vector<2x5xf32>
    %c0_33 = arith.constant 0 : index
    %c0_34 = arith.constant 0 : index
    %43 = vector.load %arg13[%c0_33, %c0_34] : memref<2x5xf32, #tpu.memory_space<vmem>>, vector<2x5xf32>
    tpu.vector_store %arg13[%c0_33, %c0_34], %42 {strides = array<i32>} : memref<2x5xf32, #tpu.memory_space<vmem>>, vector<2x5xf32>,
    return
  }
  func.func @transform_0(%arg0: i32) -> (i32, i32) {
    %c0_i32 = arith.constant 0 : i32
    %c0_i32_0 = arith.constant 0 : i32
    %c0_i32_1 = arith.constant 0 : i32
    return %c0_i32, %c0_i32_0 : i32, i32
  }
  func.func @transform_1(%arg0: i32) -> (i32, i32) {
    %c0_i32 = arith.constant 0 : i32
    %c0_i32_0 = arith.constant 0 : i32
    %c0_i32_1 = arith.constant 0 : i32
    return %c0_i32, %c0_i32_0 : i32, i32
  }
  func.func @transform_2(%arg0: i32) -> (i32, i32) {
    %c0_i32 = arith.constant 0 : i32
    %c0_i32_0 = arith.constant 0 : i32
    %c0_i32_1 = arith.constant 0 : i32
    return %c0_i32, %c0_i32_0 : i32, i32
  }
  func.func @transform_3(%arg0: i32) -> (i32, i32) {
    %c0_i32 = arith.constant 0 : i32
    %c0_i32_0 = arith.constant 0 : i32
    %c0_i32_1 = arith.constant 0 : i32
    return %c0_i32, %c0_i32_0 : i32, i32
  }
  func.func @transform_4(%arg0: i32) -> (i32, i32) {
    %c0_i32 = arith.constant 0 : i32
    %c0_i32_0 = arith.constant 0 : i32
    %c0_i32_1 = arith.constant 0 : i32
    return %c0_i32, %c0_i32_0 : i32, i32
  }
  func.func @transform_5(%arg0: i32) -> (i32, i32) {
    %c0_i32 = arith.constant 0 : i32
    %c0_i32_0 = arith.constant 0 : i32
    %c0_i32_1 = arith.constant 0 : i32
    return %c0_i32, %c0_i32_0 : i32, i32
  }
  func.func @transform_6(%arg0: i32) -> (i32, i32) {
    %c0_i32 = arith.constant 0 : i32
    %c0_i32_0 = arith.constant 0 : i32
    %c0_i32_1 = arith.constant 0 : i32
    return %c0_i32, %c0_i32_0 : i32, i32
  }
  func.func @transform_7(%arg0: i32) -> (i32, i32) {
    %c0_i32 = arith.constant 0 : i32
    %c0_i32_0 = arith.constant 0 : i32
    %c0_i32_1 = arith.constant 0 : i32
    return %c0_i32, %c0_i32_0 : i32, i32
  }
  func.func @transform_8(%arg0: i32) -> (i32, i32) {
    %c0_i32 = arith.constant 0 : i32
    %c0_i32_0 = arith.constant 0 : i32
    %c0_i32_1 = arith.constant 0 : i32
    return %c0_i32, %c0_i32_0 : i32, i32
  }
  func.func @transform_9(%arg0: i32) -> (i32, i32) {
    %c0_i32 = arith.constant 0 : i32
    %c0_i32_0 = arith.constant 0 : i32
    %c0_i32_1 = arith.constant 0 : i32
    return %c0_i32, %c0_i32_0 : i32, i32
  }
  func.func @transform_10(%arg0: i32) -> (i32, i32) {
    %c0_i32 = arith.constant 0 : i32
    %c0_i32_0 = arith.constant 0 : i32
    %c0_i32_1 = arith.constant 0 : i32
    return %c0_i32, %c0_i32_0 : i32, i32
  }
  func.func @transform_11(%arg0: i32) -> (i32, i32) {
    %c0_i32 = arith.constant 0 : i32
    %c0_i32_0 = arith.constant 0 : i32
    %c0_i32_1 = arith.constant 0 : i32
    return %c0_i32, %c0_i32_0 : i32, i32
  }
  func.func @transform_12(%arg0: i32) -> (i32, i32) {
    %c0_i32 = arith.constant 0 : i32
    %c0_i32_0 = arith.constant 0 : i32
    %c0_i32_1 = arith.constant 0 : i32
    return %c0_i32, %c0_i32_0 : i32, i32
  }
}

</mosaic_0001>

<llo_original>
// kernel: forward.3
$region0: #{forward.3}
  #allocation0 [shape = 'u32[]', space=smem, size = 0x4, offset = 0x4, fixed_abs, tag = 'smem constant byte address 0x4 - core index']
  #allocation1 [shape = 'u32[144,128]{1,0:T(1,128)}', space=vmem, size = 0x12000, scoped, tag = 'internal scratch']
  %s0 = inlined_call_operand.vmem [shape: f32[2,49,27], index: 0, kind: input, shape index: {}]
  %s1 = inlined_call_operand.vmem [shape: f32[2,49,27], index: 1, kind: input, shape index: {}]
  %s2 = inlined_call_operand.vmem [shape: f32[2,49,27], index: 2, kind: input, shape index: {}]
  %s3 = inlined_call_operand.vmem [shape: f32[2,49,27], index: 3, kind: input, shape index: {}]
  %s4 = inlined_call_operand.vmem [shape: f32[27,4], index: 4, kind: input, shape index: {}]
  %s5 = inlined_call_operand.vmem [shape: f32[1,4], index: 5, kind: input, shape index: {}]
  %s6 = inlined_call_operand.vmem [shape: f32[2,49,4], index: 6, kind: output, shape index: {}]
  %s7 = sld [smem:[#allocation0]]
  $region57: #{forward.3} parent=0
    _
  %s9 = ssub.s32 1, %s7
  %s10 = scalar_select 0, %s9, %s7
  loop: start=0, step=1, limit=4
  $region2: #{forward.3} parent=0 // loop_pre_header
    _
  $region3: #{forward.3} parent=0 // loop_header
    %s12 = sphi 0, %s16
    %p13 = scmp.ge.s32.totalorder %s12, 4
    %s22 = sphi 0, %s24
    %s25 = sphi 0, %s22
    %s26 = sphi 0, %s25
    %s42 = sphi 0, %s26
    %s48 = sphi 0, %s50
    %s51 = sphi 0, %s48
    %s52 = sphi 0, %s51
    %s68 = sphi 0, %s52
    %s74 = sphi 0, %s76
    %s77 = sphi 0, %s74
    %s78 = sphi 0, %s77
    %s94 = sphi 0, %s78
    %s100 = sphi 0, %s102
    %s103 = sphi 0, %s100
    %s104 = sphi 0, %s103
    %s120 = sphi 0, %s104
    %s124 = sphi 0, %s124
    %s126 = sphi 0, %s124
    %s127 = sphi 0, %s126
    %s141 = sphi 0, %s127
    %s145 = sphi 0, %s145
    %s147 = sphi 0, %s145
    %s148 = sphi 0, %s147
    %s162 = sphi 0, %s148
    %s168 = sphi 0, %s170
    %s171 = sphi 0, %s168
    %s172 = sphi 0, %s171
    %s188 = sphi 0, %s172
  $region4: #{forward.3} parent=0 // loop_header_branch
    %15 = sbr.rel (%p13) target = $region8
  $region5: #{forward.3} parent=0 // loop_body
    %s17 = ssub.s32 %s12, 1
    %s18 = ssub.s32 %s12, 2
    %s19 = sadd.s32 %s12, 1
    %s20 = ssub.s32 %s12, %s19
    %p21 = scmp.eq.s32.totalorder %s20, 0
    %s23 = sadd.s32 %s22, 1
    %s24 = scalar_select %p21, %s22, %s23
    %p27 = pneg %p21
    %p28 = scmp.eq.s32.totalorder %s12, 1
    %p29 = por %p27, %p28
    %p30 = scmp.ne.s32.totalorder %s22, %s25
    %p31 = scmp.eq.s32.totalorder %s12, 0
    %p32 = por %p30, %p31
    %p33 = scmp.ne.s32.totalorder %s22, %s25
    %p34 = scmp.eq.s32.totalorder %s17, 1
    %p35 = por %p33, %p34
    %p36 = scmp.ne.s32.totalorder %s25, %s26
    %p37 = scmp.eq.s32.totalorder %s17, 0
    %p38 = por %p36, %p37
    %p39 = scmp.ne.s32.totalorder %s25, %s26
    %p40 = scmp.eq.s32.totalorder %s18, 1
    %p41 = por %p39, %p40
    %p43 = scmp.ne.s32.totalorder %s26, %s42
    %p44 = scmp.eq.s32.totalorder %s18, 0
    %p45 = por %p43, %p44
    %s46 = ssub.s32 %s12, %s19
    %p47 = scmp.eq.s32.totalorder %s46, 0
    %s49 = sadd.s32 %s48, 1
    %s50 = scalar_select %p47, %s48, %s49
    %p53 = pneg %p47
    %p54 = scmp.eq.s32.totalorder %s12, 1
    %p55 = por %p53, %p54
    %p56 = scmp.ne.s32.totalorder %s48, %s51
    %p57 = scmp.eq.s32.totalorder %s12, 0
    %p58 = por %p56, %p57
    %p59 = scmp.ne.s32.totalorder %s48, %s51
    %p60 = scmp.eq.s32.totalorder %s17, 1
    %p61 = por %p59, %p60
    %p62 = scmp.ne.s32.totalorder %s51, %s52
    %p63 = scmp.eq.s32.totalorder %s17, 0
    %p64 = por %p62, %p63
    %p65 = scmp.ne.s32.totalorder %s51, %s52
    %p66 = scmp.eq.s32.totalorder %s18, 1
    %p67 = por %p65, %p66
    %p69 = scmp.ne.s32.totalorder %s52, %s68
    %p70 = scmp.eq.s32.totalorder %s18, 0
    %p71 = por %p69, %p70
    %s72 = ssub.s32 %s12, %s19
    %p73 = scmp.eq.s32.totalorder %s72, 0
    %s75 = sadd.s32 %s74, 1
    %s76 = scalar_select %p73, %s74, %s75
    %p79 = pneg %p73
    %p80 = scmp.eq.s32.totalorder %s12, 1
    %p81 = por %p79, %p80
    %p82 = scmp.ne.s32.totalorder %s74, %s77
    %p83 = scmp.eq.s32.totalorder %s12, 0
    %p84 = por %p82, %p83
    %p85 = scmp.ne.s32.totalorder %s74, %s77
    %p86 = scmp.eq.s32.totalorder %s17, 1
    %p87 = por %p85, %p86
    %p88 = scmp.ne.s32.totalorder %s77, %s78
    %p89 = scmp.eq.s32.totalorder %s17, 0
    %p90 = por %p88, %p89
    %p91 = scmp.ne.s32.totalorder %s77, %s78
    %p92 = scmp.eq.s32.totalorder %s18, 1
    %p93 = por %p91, %p92
    %p95 = scmp.ne.s32.totalorder %s78, %s94
    %p96 = scmp.eq.s32.totalorder %s18, 0
    %p97 = por %p95, %p96
    %s98 = ssub.s32 %s12, %s19
    %p99 = scmp.eq.s32.totalorder %s98, 0
    %s101 = sadd.s32 %s100, 1
    %s102 = scalar_select %p99, %s100, %s101
    %p105 = pneg %p99
    %p106 = scmp.eq.s32.totalorder %s12, 1
    %p107 = por %p105, %p106
    %p108 = scmp.ne.s32.totalorder %s100, %s103
    %p109 = scmp.eq.s32.totalorder %s12, 0
    %p110 = por %p108, %p109
    %p111 = scmp.ne.s32.totalorder %s100, %s103
    %p112 = scmp.eq.s32.totalorder %s17, 1
    %p113 = por %p111, %p112
    %p114 = scmp.ne.s32.totalorder %s103, %s104
    %p115 = scmp.eq.s32.totalorder %s17, 0
    %p116 = por %p114, %p115
    %p117 = scmp.ne.s32.totalorder %s103, %s104
    %p118 = scmp.eq.s32.totalorder %s18, 1
    %p119 = por %p117, %p118
    %p121 = scmp.ne.s32.totalorder %s104, %s120
    %p122 = scmp.eq.s32.totalorder %s18, 0
    %p123 = por %p121, %p122
    %s125 = sadd.s32 %s124, 1
    %p128 = scmp.eq.s32.totalorder %s12, 1
    %p129 = scmp.ne.s32.totalorder %s124, %s126
    %p130 = scmp.eq.s32.totalorder %s12, 0
    %p131 = por %p129, %p130
    %p132 = scmp.ne.s32.totalorder %s124, %s126
    %p133 = scmp.eq.s32.totalorder %s17, 1
    %p134 = por %p132, %p133
    %p135 = scmp.ne.s32.totalorder %s126, %s127
    %p136 = scmp.eq.s32.totalorder %s17, 0
    %p137 = por %p135, %p136
    %p138 = scmp.ne.s32.totalorder %s126, %s127
    %p139 = scmp.eq.s32.totalorder %s18, 1
    %p140 = por %p138, %p139
    %p142 = scmp.ne.s32.totalorder %s127, %s141
    %p143 = scmp.eq.s32.totalorder %s18, 0
    %p144 = por %p142, %p143
    %s146 = sadd.s32 %s145, 1
    %p149 = scmp.eq.s32.totalorder %s12, 1
    %p150 = scmp.ne.s32.totalorder %s145, %s147
    %p151 = scmp.eq.s32.totalorder %s12, 0
    %p152 = por %p150, %p151
    %p153 = scmp.ne.s32.totalorder %s145, %s147
    %p154 = scmp.eq.s32.totalorder %s17, 1
    %p155 = por %p153, %p154
    %p156 = scmp.ne.s32.totalorder %s147, %s148
    %p157 = scmp.eq.s32.totalorder %s17, 0
    %p158 = por %p156, %p157
    %p159 = scmp.ne.s32.totalorder %s147, %s148
    %p160 = scmp.eq.s32.totalorder %s18, 1
    %p161 = por %p159, %p160
    %p163 = scmp.ne.s32.totalorder %s148, %s162
    %p164 = scmp.eq.s32.totalorder %s18, 0
    %p165 = por %p163, %p164
    %s166 = ssub.s32 %s12, %s19
    %p167 = scmp.eq.s32.totalorder %s166, 0
    %s169 = sadd.s32 %s168, 1
    %s170 = scalar_select %p167, %s168, %s169
    %p173 = pneg %p167
    %p174 = scmp.eq.s32.totalorder %s12, 1
    %p175 = por %p173, %p174
    %p176 = scmp.ne.s32.totalorder %s168, %s171
    %p177 = scmp.eq.s32.totalorder %s12, 0
    %p178 = por %p176, %p177
    %p179 = scmp.ne.s32.totalorder %s168, %s171
    %p180 = scmp.eq.s32.totalorder %s17, 1
    %p181 = por %p179, %p180
    %p182 = scmp.ne.s32.totalorder %s171, %s172
    %p183 = scmp.eq.s32.totalorder %s17, 0
    %p184 = por %p182, %p183
    %p185 = scmp.ne.s32.totalorder %s171, %s172
    %p186 = scmp.eq.s32.totalorder %s18, 1
    %p187 = por %p185, %p186
    %p189 = scmp.ne.s32.totalorder %s172, %s188
    %p190 = scmp.eq.s32.totalorder %s18, 0
    %p191 = por %p189, %p190
    %p192 = scmp.le.s32.totalorder 1, %s12
    %p193 = scmp.lt.s32.totalorder %s12, 3
    %p194 = pnand %p192, %p193
    %p195 = pneg %p194
    // Predicated region
    $region9: #{forward.3} parent=5 // pred_check
      _
    $region10: #{forward.3} parent=5 // pred_check_branch
      %197 = sbr.rel (%p194) target = $region12
    $region11: #{forward.3} parent=5 // pred_region
      %s198 = ssub.s32 %s12, 1
      // Predicated region
      $region13: #{forward.3} parent=11 // pred_check
        %p199 = pneg %p137
      $region14: #{forward.3} parent=11 // pred_check_branch
        %201 = sbr.rel (%p199) target = $region16
      $region15: #{forward.3} parent=11 // pred_region
        _
      $region16: #{forward.3} parent=11 // pred_fallthru
        _
      // Predicated region
      $region17: #{forward.3} parent=11 // pred_check
        %p202 = pneg %p158
      $region18: #{forward.3} parent=11 // pred_check_branch
        %204 = sbr.rel (%p202) target = $region20
      $region19: #{forward.3} parent=11 // pred_region
        _
      $region20: #{forward.3} parent=11 // pred_fallthru
        _
    $region12: #{forward.3} parent=5 // pred_fallthru
      _
    %p205 = scmp.lt.s32.totalorder %s12, 2
    // Predicated region
    $region21: #{forward.3} parent=5 // pred_check
      %p206 = pneg %p205
    $region22: #{forward.3} parent=5 // pred_check_branch
      %208 = sbr.rel (%p206) target = $region24
    $region23: #{forward.3} parent=5 // pred_region
      // Predicated region
      $region25: #{forward.3} parent=23 // pred_check
        %p209 = pneg %p32
      $region26: #{forward.3} parent=23 // pred_check_branch
        %211 = sbr.rel (%p209) target = $region28
      $region27: #{forward.3} parent=23 // pred_region
        %p212 = scmp.lt.s32.totalorder %s12, 1
        %s213 = scalar_select %p212, %s12, 1
        %s214 = smul.addr %s213, 7
        %s215 = smul.addr %s214, 8
        %s216 = scalar_lea.vmem %s0, %s215
      $region28: #{forward.3} parent=23 // pred_fallthru
        _
      // Predicated region
      $region29: #{forward.3} parent=23 // pred_check
        %p217 = pneg %p58
      $region30: #{forward.3} parent=23 // pred_check_branch
        %219 = sbr.rel (%p217) target = $region32
      $region31: #{forward.3} parent=23 // pred_region
        %p220 = scmp.lt.s32.totalorder %s12, 1
        %s221 = scalar_select %p220, %s12, 1
        %s222 = smul.addr %s221, 7
        %s223 = smul.addr %s222, 8
        %s224 = scalar_lea.vmem %s1, %s223
      $region32: #{forward.3} parent=23 // pred_fallthru
        _
      // Predicated region
      $region33: #{forward.3} parent=23 // pred_check
        %p225 = pneg %p84
      $region34: #{forward.3} parent=23 // pred_check_branch
        %227 = sbr.rel (%p225) target = $region36
      $region35: #{forward.3} parent=23 // pred_region
        %p228 = scmp.lt.s32.totalorder %s12, 1
        %s229 = scalar_select %p228, %s12, 1
        %s230 = smul.addr %s229, 7
        %s231 = smul.addr %s230, 8
        %s232 = scalar_lea.vmem %s2, %s231
      $region36: #{forward.3} parent=23 // pred_fallthru
        _
      // Predicated region
      $region37: #{forward.3} parent=23 // pred_check
        %p233 = pneg %p110
      $region38: #{forward.3} parent=23 // pred_check_branch
        %235 = sbr.rel (%p233) target = $region40
      $region39: #{forward.3} parent=23 // pred_region
        %p236 = scmp.lt.s32.totalorder %s12, 1
        %s237 = scalar_select %p236, %s12, 1
        %s238 = smul.addr %s237, 7
        %s239 = smul.addr %s238, 8
        %s240 = scalar_lea.vmem %s3, %s239
      $region40: #{forward.3} parent=23 // pred_fallthru
        _
    $region24: #{forward.3} parent=5 // pred_fallthru
      _
    %p241 = scmp.le.s32.totalorder 1, %s12
    %p242 = scmp.lt.s32.totalorder %s12, 3
    %p243 = pnand %p241, %p242
    %p244 = pneg %p243
    // Predicated region
    $region41: #{forward.3} parent=5 // pred_check
      _
    $region42: #{forward.3} parent=5 // pred_check_branch
      %246 = sbr.rel (%p243) target = $region44
    $region43: #{forward.3} parent=5 // pred_region
      %s247 = ssub.s32 %s12, 1
      %p248 = scmp.lt.s32.totalorder %s17, 1
      %s249 = scalar_select %p248, %s17, 1
      %s250 = smul.addr %s249, 7
      %s251 = smul.addr %s250, 8
      %s252 = scalar_lea.vmem %s0, %s251
      %p253 = pneg %p38
      %p254 = pneg %p35
      %p255 = scmp.lt.s32.totalorder %s17, 1
      %s256 = scalar_select %p255, %s17, 1
      %s257 = smul.addr %s256, 7
      %s258 = smul.addr %s257, 8
      %s259 = scalar_lea.vmem %s1, %s258
      %p260 = pneg %p64
      %p261 = pneg %p61
      %p262 = scmp.lt.s32.totalorder %s17, 1
      %s263 = scalar_select %p262, %s17, 1
      %s264 = smul.addr %s263, 7
      %s265 = smul.addr %s264, 8
      %s266 = scalar_lea.vmem %s2, %s265
      %p267 = pneg %p90
      %p268 = pneg %p87
      %p269 = scmp.lt.s32.totalorder %s17, 1
      %s270 = scalar_select %p269, %s17, 1
      %s271 = smul.addr %s270, 7
      %s272 = smul.addr %s271, 8
      %s273 = scalar_lea.vmem %s3, %s272
      %p274 = pneg %p116
      %p275 = pneg %p113
      %p276 = pneg %p137
      %p277 = pneg %p134
      %p278 = pneg %p158
      %p279 = pneg %p155
      %p280 = pneg %p184
      %p281 = pneg %p181
      %p282 = scmp.lt.s32.totalorder %s17, 1
      %s283 = scalar_select %p282, %s17, 1
      %s284 = smul.addr %s283, 7
      %s285 = smul.addr %s284, 8
      %s286 = scalar_lea.vmem %s6, %s285
      %p287 = scmp.lt.s32.totalorder %s17, 1
      %s288 = scalar_select %p287, %s17, 1
      %s289 = smul.addr %s288, 7
      %s290 = smul.addr %s289, 8
      %s291 = scalar_lea.vmem %s0, %s290
      %p292 = scmp.lt.s32.totalorder %s17, 1
      %s293 = scalar_select %p292, %s17, 1
      %s294 = smul.addr %s293, 7
      %s295 = smul.addr %s294, 8
      %s296 = scalar_lea.vmem %s1, %s295
      %p297 = scmp.lt.s32.totalorder %s17, 1
      %s298 = scalar_select %p297, %s17, 1
      %s299 = smul.addr %s298, 7
      %s300 = smul.addr %s299, 8
      %s301 = scalar_lea.vmem %s2, %s300
      %p302 = scmp.lt.s32.totalorder %s17, 1
      %s303 = scalar_select %p302, %s17, 1
      %s304 = smul.addr %s303, 7
      %s305 = smul.addr %s304, 8
      %s306 = scalar_lea.vmem %s3, %s305
      %p307 = scmp.lt.s32.totalorder %s17, 1
      %s308 = scalar_select %p307, %s17, 1
      %s309 = smul.addr %s308, 7
      %s310 = smul.addr %s309, 8
      %s311 = scalar_lea.vmem %s6, %s310
      %v312 = vld [vmem:[%s4] sm:$0xff]
      %v313 = vld [vmem:[%s4 + $0x8] sm:$0xff]
      %v314 = vld [vmem:[%s4 + $0x10] sm:$0xff]
      %v315 = vld [vmem:[%s4 + $0x18] sm:$0x7]
      %v316 = vld [vmem:[%s5] sm:$0x1]
      %v317 = vld [vmem:[%s291] sm:$0xff]
      %v318 = vld [vmem:[%s291 + $0x8] sm:$0xff]
      %v319 = vld [vmem:[%s291 + $0x10] sm:$0xff]
      %v320 = vld [vmem:[%s291 + $0x18] sm:$0xff]
      %v321 = vld [vmem:[%s291 + $0x20] sm:$0xff]
      %v322 = vld [vmem:[%s291 + $0x28] sm:$0xff]
      %v323 = vld [vmem:[%s291 + $0x30] sm:$0x1]
      %v325 = vlaneseq
      %v326 = vshrl.u32 %v325, 7
      %v327 = vsub.s32 0, %v326
      %v328 = vrot.slane %v316, %v327
      %vm330 = vcmask 220160
      %v332 = vsel %vm330, %v317, 0
      %v335 = vsel %vm330, %v318, 0
      %v338 = vsel %vm330, %v319, 0
      %v341 = vsel %vm330, %v320, 0
      %v344 = vsel %vm330, %v321, 0
      %v347 = vsel %vm330, %v322, 0
      %v350 = vsel %vm330, %v323, 0
      %vm352 = vcmask 1042432
      %v354 = vsel %vm352, %v315, 0
      %356 = vmatprep.subr.mxu0 0.0
      %357 = vmatpush1.msra.mxu0 %v312
      %358 = vmatprep.subr.mxu0 0.0
      %359 = vmatpush1.msra.mxu0 %v313
      %360 = vmatprep.subr.mxu0 0.0
      %361 = vmatpush1.msra.mxu0 %v314
      %362 = vmatprep.subr.mxu0 0.0
      %363 = vmatpush1.msra.mxu0 %v354
      %364 = vmatprep.subr.mxu0 0.0
      %365 = vmatpush1.msra.mxu0 0.0
      %366 = vmatprep.subr.mxu0 0.0
      %367 = vmatpush1.msra.mxu0 0.0
      %368 = vmatprep.subr.mxu0 0.0
      %369 = vmatpush1.msra.mxu0 0.0
      %370 = vmatprep.subr.mxu0 0.0
      %371 = vmatpush1.msra.mxu0 0.0
      %372 = vmatprep.subr.mxu0 0.0
      %373 = vmatpush1.msra.mxu0 0.0
      %374 = vmatprep.subr.mxu0 0.0
      %375 = vmatpush1.msra.mxu0 0.0
      %376 = vmatprep.subr.mxu0 0.0
      %377 = vmatpush1.msra.mxu0 0.0
      %378 = vmatprep.subr.mxu0 0.0
      %379 = vmatpush1.msra.mxu0 0.0
      %380 = vmatprep.subr.mxu0 0.0
      %381 = vmatpush1.msra.mxu0 0.0
      %382 = vmatprep.subr.mxu0 0.0
      %383 = vmatpush1.msra.mxu0 0.0
      %384 = vmatprep.subr.mxu0 0.0
      %385 = vmatpush1.msra.mxu0 0.0
      %386 = vmatprep.subr.mxu0 0.0
      %387 = vmatpush1.msra.mxu0 0.0
      %388 = vmatprep.subr.mxu0 0.0
      %389 = vmatpush1.msra.mxu0 0.0
      %390 = vmatprep.subr.mxu0 0.0
      %391 = vmatpush1.msra.mxu0 0.0
      %392 = vmatprep.subr.mxu0 0.0
      %393 = vmatpush1.msra.mxu0 0.0
      %394 = vmatprep.subr.mxu0 0.0
      %395 = vmatpush1.msra.mxu0 0.0
      %396 = vmatprep.subr.mxu0 0.0
      %397 = vmatpush1.msra.mxu0 0.0
      %398 = vmatprep.subr.mxu0 0.0
      %399 = vmatpush1.msra.mxu0 0.0
      %400 = vmatprep.subr.mxu0 0.0
      %401 = vmatpush1.msra.mxu0 0.0
      %402 = vmatprep.subr.mxu0 0.0
      %403 = vmatpush1.msra.mxu0 0.0
      %404 = vmatprep.subr.mxu0 0.0
      %405 = vmatpush1.msra.mxu0 0.0
      %406 = vmatprep.subr.mxu0 0.0
      %407 = vmatpush1.msra.mxu0 0.0
      %408 = vmatprep.subr.mxu0 0.0
      %409 = vmatpush1.msra.mxu0 0.0
      %410 = vmatprep.subr.mxu0 0.0
      %411 = vmatpush1.msra.mxu0 0.0
      %412 = vmatprep.subr.mxu0 0.0
      %413 = vmatpush1.msra.mxu0 0.0
      %414 = vmatprep.subr.mxu0 0.0
      %415 = vmatpush1.msra.mxu0 0.0
      %416 = vmatprep.subr.mxu0 0.0
      %417 = vmatpush1.msra.mxu0 0.0
      %418 = vmatprep.subr.mxu0 0.0
      %419 = vmatpush1.msra.mxu0 0.0
      %420 = vmatprep.mubr.f32.mxu0 0.0
      %421 = vmatmul.mubr.f32.gmra.mrb[0].mxu0 %v332
      %v422 = vpop.f32.mrb[0].mxu0
      %v423 = vadd.f32 %v328, %v422
      %v424 = vpop.f32.mrb[0].mxu0
      %425 = vmatprep.mubr.f32.mxu0 0.0
      %426 = vmatmul.mubr.f32.gmra.mrb[0].mxu0 %v335
      %v427 = vpop.f32.mrb[0].mxu0
      %v428 = vadd.f32 %v328, %v427
      %v429 = vpop.f32.mrb[0].mxu0
      %430 = vmatprep.mubr.f32.mxu0 0.0
      %431 = vmatmul.mubr.f32.gmra.mrb[0].mxu0 %v338
      %v432 = vpop.f32.mrb[0].mxu0
      %v433 = vadd.f32 %v328, %v432
      %v434 = vpop.f32.mrb[0].mxu0
      %435 = vmatprep.mubr.f32.mxu0 0.0
      %436 = vmatmul.mubr.f32.gmra.mrb[0].mxu0 %v341
      %v437 = vpop.f32.mrb[0].mxu0
      %v438 = vadd.f32 %v328, %v437
      %v439 = vpop.f32.mrb[0].mxu0
      %440 = vmatprep.mubr.f32.mxu0 0.0
      %441 = vmatmul.mubr.f32.gmra.mrb[0].mxu0 %v344
      %v442 = vpop.f32.mrb[0].mxu0
      %v443 = vadd.f32 %v328, %v442
      %v444 = vpop.f32.mrb[0].mxu0
      %445 = vmatprep.mubr.f32.mxu0 0.0
      %446 = vmatmul.mubr.f32.gmra.mrb[0].mxu0 %v347
      %v447 = vpop.f32.mrb[0].mxu0
      %v448 = vadd.f32 %v328, %v447
      %v449 = vpop.f32.mrb[0].mxu0
      %450 = vmatprep.mubr.f32.mxu0 0.0
      %451 = vmatmul.mubr.f32.gmra.mrb[0].mxu0 %v350
      %v452 = vpop.f32.mrb[0].mxu0
      %v453 = vadd.f32 %v328, %v452
      %v454 = vpop.f32.mrb[0].mxu0
      %455 = vdwg.mxu0
      %v456 = vmax.f32 %v423, 0.0
      %v457 = vmax.f32 %v428, 0.0
      %v458 = vmax.f32 %v433, 0.0
      %v459 = vmax.f32 %v438, 0.0
      %v460 = vmax.f32 %v443, 0.0
      %v461 = vmax.f32 %v448, 0.0
      %v462 = vmax.f32 %v453, 0.0
      %v463 = vld [vmem:[%s296] sm:$0xff]
      %v464 = vld [vmem:[%s296 + $0x8] sm:$0xff]
      %v465 = vld [vmem:[%s296 + $0x10] sm:$0xff]
      %v466 = vld [vmem:[%s296 + $0x18] sm:$0xff]
      %v467 = vld [vmem:[%s296 + $0x20] sm:$0xff]
      %v468 = vld [vmem:[%s296 + $0x28] sm:$0xff]
      %v469 = vld [vmem:[%s296 + $0x30] sm:$0x1]
      %v471 = vsel %vm330, %v463, 0
      %v474 = vsel %vm330, %v464, 0
      %v477 = vsel %vm330, %v465, 0
      %v480 = vsel %vm330, %v466, 0
      %v483 = vsel %vm330, %v467, 0
      %v486 = vsel %vm330, %v468, 0
      %v489 = vsel %vm330, %v469, 0
      %491 = vmatprep.subr.mxu0 0.0
      %492 = vmatpush1.msra.mxu0 %v312
      %493 = vmatprep.subr.mxu0 0.0
      %494 = vmatpush1.msra.mxu0 %v313
      %495 = vmatprep.subr.mxu0 0.0
      %496 = vmatpush1.msra.mxu0 %v314
      %497 = vmatprep.subr.mxu0 0.0
      %498 = vmatpush1.msra.mxu0 %v354
      %499 = vmatprep.subr.mxu0 0.0
      %500 = vmatpush1.msra.mxu0 0.0
      %501 = vmatprep.subr.mxu0 0.0
      %502 = vmatpush1.msra.mxu0 0.0
      %503 = vmatprep.subr.mxu0 0.0
      %504 = vmatpush1.msra.mxu0 0.0
      %505 = vmatprep.subr.mxu0 0.0
      %506 = vmatpush1.msra.mxu0 0.0
      %507 = vmatprep.subr.mxu0 0.0
      %508 = vmatpush1.msra.mxu0 0.0
      %509 = vmatprep.subr.mxu0 0.0
      %510 = vmatpush1.msra.mxu0 0.0
      %511 = vmatprep.subr.mxu0 0.0
      %512 = vmatpush1.msra.mxu0 0.0
      %513 = vmatprep.subr.mxu0 0.0
      %514 = vmatpush1.msra.mxu0 0.0
      %515 = vmatprep.subr.mxu0 0.0
      %516 = vmatpush1.msra.mxu0 0.0
      %517 = vmatprep.subr.mxu0 0.0
      %518 = vmatpush1.msra.mxu0 0.0
      %519 = vmatprep.subr.mxu0 0.0
      %520 = vmatpush1.msra.mxu0 0.0
      %521 = vmatprep.subr.mxu0 0.0
      %522 = vmatpush1.msra.mxu0 0.0
      %523 = vmatprep.subr.mxu0 0.0
      %524 = vmatpush1.msra.mxu0 0.0
      %525 = vmatprep.subr.mxu0 0.0
      %526 = vmatpush1.msra.mxu0 0.0
      %527 = vmatprep.subr.mxu0 0.0
      %528 = vmatpush1.msra.mxu0 0.0
      %529 = vmatprep.subr.mxu0 0.0
      %530 = vmatpush1.msra.mxu0 0.0
      %531 = vmatprep.subr.mxu0 0.0
      %532 = vmatpush1.msra.mxu0 0.0
      %533 = vmatprep.subr.mxu0 0.0
      %534 = vmatpush1.msra.mxu0 0.0
      %535 = vmatprep.subr.mxu0 0.0
      %536 = vmatpush1.msra.mxu0 0.0
      %537 = vmatprep.subr.mxu0 0.0
      %538 = vmatpush1.msra.mxu0 0.0
      %539 = vmatprep.subr.mxu0 0.0
      %540 = vmatpush1.msra.mxu0 0.0
      %541 = vmatprep.subr.mxu0 0.0
      %542 = vmatpush1.msra.mxu0 0.0
      %543 = vmatprep.subr.mxu0 0.0
      %544 = vmatpush1.msra.mxu0 0.0
      %545 = vmatprep.subr.mxu0 0.0
      %546 = vmatpush1.msra.mxu0 0.0
      %547 = vmatprep.subr.mxu0 0.0
      %548 = vmatpush1.msra.mxu0 0.0
      %549 = vmatprep.subr.mxu0 0.0
      %550 = vmatpush1.msra.mxu0 0.0
      %551 = vmatprep.subr.mxu0 0.0
      %552 = vmatpush1.msra.mxu0 0.0
      %553 = vmatprep.subr.mxu0 0.0
      %554 = vmatpush1.msra.mxu0 0.0
      %555 = vmatprep.mubr.f32.mxu0 0.0
      %556 = vmatmul.mubr.f32.gmra.mrb[0].mxu0 %v471
      %v557 = vpop.f32.mrb[0].mxu0
      %v558 = vadd.f32 %v328, %v557
      %v559 = vpop.f32.mrb[0].mxu0
      %560 = vmatprep.mubr.f32.mxu0 0.0
      %561 = vmatmul.mubr.f32.gmra.mrb[0].mxu0 %v474
      %v562 = vpop.f32.mrb[0].mxu0
      %v563 = vadd.f32 %v328, %v562
      %v564 = vpop.f32.mrb[0].mxu0
      %565 = vmatprep.mubr.f32.mxu0 0.0
      %566 = vmatmul.mubr.f32.gmra.mrb[0].mxu0 %v477
      %v567 = vpop.f32.mrb[0].mxu0
      %v568 = vadd.f32 %v328, %v567
      %v569 = vpop.f32.mrb[0].mxu0
      %570 = vmatprep.mubr.f32.mxu0 0.0
      %571 = vmatmul.mubr.f32.gmra.mrb[0].mxu0 %v480
      %v572 = vpop.f32.mrb[0].mxu0
      %v573 = vadd.f32 %v328, %v572
      %v574 = vpop.f32.mrb[0].mxu0
      %575 = vmatprep.mubr.f32.mxu0 0.0
      %576 = vmatmul.mubr.f32.gmra.mrb[0].mxu0 %v483
      %v577 = vpop.f32.mrb[0].mxu0
      %v578 = vadd.f32 %v328, %v577
      %v579 = vpop.f32.mrb[0].mxu0
      %580 = vmatprep.mubr.f32.mxu0 0.0
      %581 = vmatmul.mubr.f32.gmra.mrb[0].mxu0 %v486
      %v582 = vpop.f32.mrb[0].mxu0
      %v583 = vadd.f32 %v328, %v582
      %v584 = vpop.f32.mrb[0].mxu0
      %585 = vmatprep.mubr.f32.mxu0 0.0
      %586 = vmatmul.mubr.f32.gmra.mrb[0].mxu0 %v489
      %v587 = vpop.f32.mrb[0].mxu0
      %v588 = vadd.f32 %v328, %v587
      %v589 = vpop.f32.mrb[0].mxu0
      %590 = vdwg.mxu0
      %v591 = vmax.f32 %v558, 0.0
      %v592 = vmax.f32 %v563, 0.0
      %v593 = vmax.f32 %v568, 0.0
      %v594 = vmax.f32 %v573, 0.0
      %v595 = vmax.f32 %v578, 0.0
      %v596 = vmax.f32 %v583, 0.0
      %v597 = vmax.f32 %v588, 0.0
      %v598 = vmax.f32 %v456, %v591
      %v599 = vmax.f32 %v457, %v592
      %v600 = vmax.f32 %v458, %v593
      %v601 = vmax.f32 %v459, %v594
      %v602 = vmax.f32 %v460, %v595
      %v603 = vmax.f32 %v461, %v596
      %v604 = vmax.f32 %v462, %v597
      %v605 = vld [vmem:[%s301] sm:$0xff]
      %v606 = vld [vmem:[%s301 + $0x8] sm:$0xff]
      %v607 = vld [vmem:[%s301 + $0x10] sm:$0xff]
      %v608 = vld [vmem:[%s301 + $0x18] sm:$0xff]
      %v609 = vld [vmem:[%s301 + $0x20] sm:$0xff]
      %v610 = vld [vmem:[%s301 + $0x28] sm:$0xff]
      %v611 = vld [vmem:[%s301 + $0x30] sm:$0x1]
      %v613 = vsel %vm330, %v605, 0
      %v616 = vsel %vm330, %v606, 0
      %v619 = vsel %vm330, %v607, 0
      %v622 = vsel %vm330, %v608, 0
      %v625 = vsel %vm330, %v609, 0
      %v628 = vsel %vm330, %v610, 0
      %v631 = vsel %vm330, %v611, 0
      %633 = vmatprep.subr.mxu0 0.0
      %634 = vmatpush1.msra.mxu0 %v312
      %635 = vmatprep.subr.mxu0 0.0
      %636 = vmatpush1.msra.mxu0 %v313
      %637 = vmatprep.subr.mxu0 0.0
      %638 = vmatpush1.msra.mxu0 %v314
      %639 = vmatprep.subr.mxu0 0.0
      %640 = vmatpush1.msra.mxu0 %v354
      %641 = vmatprep.subr.mxu0 0.0
      %642 = vmatpush1.msra.mxu0 0.0
      %643 = vmatprep.subr.mxu0 0.0
      %644 = vmatpush1.msra.mxu0 0.0
      %645 = vmatprep.subr.mxu0 0.0
      %646 = vmatpush1.msra.mxu0 0.0
      %647 = vmatprep.subr.mxu0 0.0
      %648 = vmatpush1.msra.mxu0 0.0
      %649 = vmatprep.subr.mxu0 0.0
      %650 = vmatpush1.msra.mxu0 0.0
      %651 = vmatprep.subr.mxu0 0.0
      %652 = vmatpush1.msra.mxu0 0.0
      %653 = vmatprep.subr.mxu0 0.0
      %654 = vmatpush1.msra.mxu0 0.0
      %655 = vmatprep.subr.mxu0 0.0
      %656 = vmatpush1.msra.mxu0 0.0
      %657 = vmatprep.subr.mxu0 0.0
      %658 = vmatpush1.msra.mxu0 0.0
      %659 = vmatprep.subr.mxu0 0.0
      %660 = vmatpush1.msra.mxu0 0.0
      %661 = vmatprep.subr.mxu0 0.0
      %662 = vmatpush1.msra.mxu0 0.0
      %663 = vmatprep.subr.mxu0 0.0
      %664 = vmatpush1.msra.mxu0 0.0
      %665 = vmatprep.subr.mxu0 0.0
      %666 = vmatpush1.msra.mxu0 0.0
      %667 = vmatprep.subr.mxu0 0.0
      %668 = vmatpush1.msra.mxu0 0.0
      %669 = vmatprep.subr.mxu0 0.0
      %670 = vmatpush1.msra.mxu0 0.0
      %671 = vmatprep.subr.mxu0 0.0
      %672 = vmatpush1.msra.mxu0 0.0
      %673 = vmatprep.subr.mxu0 0.0
      %674 = vmatpush1.msra.mxu0 0.0
      %675 = vmatprep.subr.mxu0 0.0
      %676 = vmatpush1.msra.mxu0 0.0
      %677 = vmatprep.subr.mxu0 0.0
      %678 = vmatpush1.msra.mxu0 0.0
      %679 = vmatprep.subr.mxu0 0.0
      %680 = vmatpush1.msra.mxu0 0.0
      %681 = vmatprep.subr.mxu0 0.0
      %682 = vmatpush1.msra.mxu0 0.0
      %683 = vmatprep.subr.mxu0 0.0
      %684 = vmatpush1.msra.mxu0 0.0
      %685 = vmatprep.subr.mxu0 0.0
      %686 = vmatpush1.msra.mxu0 0.0
      %687 = vmatprep.subr.mxu0 0.0
      %688 = vmatpush1.msra.mxu0 0.0
      %689 = vmatprep.subr.mxu0 0.0
      %690 = vmatpush1.msra.mxu0 0.0
      %691 = vmatprep.subr.mxu0 0.0
      %692 = vmatpush1.msra.mxu0 0.0
      %693 = vmatprep.subr.mxu0 0.0
      %694 = vmatpush1.msra.mxu0 0.0
      %695 = vmatprep.subr.mxu0 0.0
      %696 = vmatpush1.msra.mxu0 0.0
      %697 = vmatprep.mubr.f32.mxu0 0.0
      %698 = vmatmul.mubr.f32.gmra.mrb[0].mxu0 %v613
      %v699 = vpop.f32.mrb[0].mxu0
      %v700 = vadd.f32 %v328, %v699
      %v701 = vpop.f32.mrb[0].mxu0
      %702 = vmatprep.mubr.f32.mxu0 0.0
      %703 = vmatmul.mubr.f32.gmra.mrb[0].mxu0 %v616
      %v704 = vpop.f32.mrb[0].mxu0
      %v705 = vadd.f32 %v328, %v704
      %v706 = vpop.f32.mrb[0].mxu0
      %707 = vmatprep.mubr.f32.mxu0 0.0
      %708 = vmatmul.mubr.f32.gmra.mrb[0].mxu0 %v619
      %v709 = vpop.f32.mrb[0].mxu0
      %v710 = vadd.f32 %v328, %v709
      %v711 = vpop.f32.mrb[0].mxu0
      %712 = vmatprep.mubr.f32.mxu0 0.0
      %713 = vmatmul.mubr.f32.gmra.mrb[0].mxu0 %v622
      %v714 = vpop.f32.mrb[0].mxu0
      %v715 = vadd.f32 %v328, %v714
      %v716 = vpop.f32.mrb[0].mxu0
      %717 = vmatprep.mubr.f32.mxu0 0.0
      %718 = vmatmul.mubr.f32.gmra.mrb[0].mxu0 %v625
      %v719 = vpop.f32.mrb[0].mxu0
      %v720 = vadd.f32 %v328, %v719
      %v721 = vpop.f32.mrb[0].mxu0
      %722 = vmatprep.mubr.f32.mxu0 0.0
      %723 = vmatmul.mubr.f32.gmra.mrb[0].mxu0 %v628
      %v724 = vpop.f32.mrb[0].mxu0
      %v725 = vadd.f32 %v328, %v724
      %v726 = vpop.f32.mrb[0].mxu0
      %727 = vmatprep.mubr.f32.mxu0 0.0
      %728 = vmatmul.mubr.f32.gmra.mrb[0].mxu0 %v631
      %v729 = vpop.f32.mrb[0].mxu0
      %v730 = vadd.f32 %v328, %v729
      %v731 = vpop.f32.mrb[0].mxu0
      %732 = vdwg.mxu0
      %v733 = vmax.f32 %v700, 0.0
      %v734 = vmax.f32 %v705, 0.0
      %v735 = vmax.f32 %v710, 0.0
      %v736 = vmax.f32 %v715, 0.0
      %v737 = vmax.f32 %v720, 0.0
      %v738 = vmax.f32 %v725, 0.0
      %v739 = vmax.f32 %v730, 0.0
      %v740 = vld [vmem:[%s306] sm:$0xff]
      %v741 = vld [vmem:[%s306 + $0x8] sm:$0xff]
      %v742 = vld [vmem:[%s306 + $0x10] sm:$0xff]
      %v743 = vld [vmem:[%s306 + $0x18] sm:$0xff]
      %v744 = vld [vmem:[%s306 + $0x20] sm:$0xff]
      %v745 = vld [vmem:[%s306 + $0x28] sm:$0xff]
      %v746 = vld [vmem:[%s306 + $0x30] sm:$0x1]
      %v748 = vsel %vm330, %v740, 0
      %v751 = vsel %vm330, %v741, 0
      %v754 = vsel %vm330, %v742, 0
      %v757 = vsel %vm330, %v743, 0
      %v760 = vsel %vm330, %v744, 0
      %v763 = vsel %vm330, %v745, 0
      %v766 = vsel %vm330, %v746, 0
      %768 = vmatprep.subr.mxu0 0.0
      %769 = vmatpush1.msra.mxu0 %v312
      %770 = vmatprep.subr.mxu0 0.0
      %771 = vmatpush1.msra.mxu0 %v313
      %772 = vmatprep.subr.mxu0 0.0
      %773 = vmatpush1.msra.mxu0 %v314
      %774 = vmatprep.subr.mxu0 0.0
      %775 = vmatpush1.msra.mxu0 %v354
      %776 = vmatprep.subr.mxu0 0.0
      %777 = vmatpush1.msra.mxu0 0.0
      %778 = vmatprep.subr.mxu0 0.0
      %779 = vmatpush1.msra.mxu0 0.0
      %780 = vmatprep.subr.mxu0 0.0
      %781 = vmatpush1.msra.mxu0 0.0
      %782 = vmatprep.subr.mxu0 0.0
      %783 = vmatpush1.msra.mxu0 0.0
      %784 = vmatprep.subr.mxu0 0.0
      %785 = vmatpush1.msra.mxu0 0.0
      %786 = vmatprep.subr.mxu0 0.0
      %787 = vmatpush1.msra.mxu0 0.0
      %788 = vmatprep.subr.mxu0 0.0
      %789 = vmatpush1.msra.mxu0 0.0
      %790 = vmatprep.subr.mxu0 0.0
      %791 = vmatpush1.msra.mxu0 0.0
      %792 = vmatprep.subr.mxu0 0.0
      %793 = vmatpush1.msra.mxu0 0.0
      %794 = vmatprep.subr.mxu0 0.0
      %795 = vmatpush1.msra.mxu0 0.0
      %796 = vmatprep.subr.mxu0 0.0
      %797 = vmatpush1.msra.mxu0 0.0
      %798 = vmatprep.subr.mxu0 0.0
      %799 = vmatpush1.msra.mxu0 0.0
      %800 = vmatprep.subr.mxu0 0.0
      %801 = vmatpush1.msra.mxu0 0.0
      %802 = vmatprep.subr.mxu0 0.0
      %803 = vmatpush1.msra.mxu0 0.0
      %804 = vmatprep.subr.mxu0 0.0
      %805 = vmatpush1.msra.mxu0 0.0
      %806 = vmatprep.subr.mxu0 0.0
      %807 = vmatpush1.msra.mxu0 0.0
      %808 = vmatprep.subr.mxu0 0.0
      %809 = vmatpush1.msra.mxu0 0.0
      %810 = vmatprep.subr.mxu0 0.0
      %811 = vmatpush1.msra.mxu0 0.0
      %812 = vmatprep.subr.mxu0 0.0
      %813 = vmatpush1.msra.mxu0 0.0
      %814 = vmatprep.subr.mxu0 0.0
      %815 = vmatpush1.msra.mxu0 0.0
      %816 = vmatprep.subr.mxu0 0.0
      %817 = vmatpush1.msra.mxu0 0.0
      %818 = vmatprep.subr.mxu0 0.0
      %819 = vmatpush1.msra.mxu0 0.0
      %820 = vmatprep.subr.mxu0 0.0
      %821 = vmatpush1.msra.mxu0 0.0
      %822 = vmatprep.subr.mxu0 0.0
      %823 = vmatpush1.msra.mxu0 0.0
      %824 = vmatprep.subr.mxu0 0.0
      %825 = vmatpush1.msra.mxu0 0.0
      %826 = vmatprep.subr.mxu0 0.0
      %827 = vmatpush1.msra.mxu0 0.0
      %828 = vmatprep.subr.mxu0 0.0
      %829 = vmatpush1.msra.mxu0 0.0
      %830 = vmatprep.subr.mxu0 0.0
      %831 = vmatpush1.msra.mxu0 0.0
      %832 = vmatprep.mubr.f32.mxu0 0.0
      %833 = vmatmul.mubr.f32.gmra.mrb[0].mxu0 %v748
      %v834 = vpop.f32.mrb[0].mxu0
      %v835 = vadd.f32 %v328, %v834
      %v836 = vpop.f32.mrb[0].mxu0
      %837 = vmatprep.mubr.f32.mxu0 0.0
      %838 = vmatmul.mubr.f32.gmra.mrb[0].mxu0 %v751
      %v839 = vpop.f32.mrb[0].mxu0
      %v840 = vadd.f32 %v328, %v839
      %v841 = vpop.f32.mrb[0].mxu0
      %842 = vmatprep.mubr.f32.mxu0 0.0
      %843 = vmatmul.mubr.f32.gmra.mrb[0].mxu0 %v754
      %v844 = vpop.f32.mrb[0].mxu0
      %v845 = vadd.f32 %v328, %v844
      %v846 = vpop.f32.mrb[0].mxu0
      %847 = vmatprep.mubr.f32.mxu0 0.0
      %848 = vmatmul.mubr.f32.gmra.mrb[0].mxu0 %v757
      %v849 = vpop.f32.mrb[0].mxu0
      %v850 = vadd.f32 %v328, %v849
      %v851 = vpop.f32.mrb[0].mxu0
      %852 = vmatprep.mubr.f32.mxu0 0.0
      %853 = vmatmul.mubr.f32.gmra.mrb[0].mxu0 %v760
      %v854 = vpop.f32.mrb[0].mxu0
      %v855 = vadd.f32 %v328, %v854
      %v856 = vpop.f32.mrb[0].mxu0
      %857 = vmatprep.mubr.f32.mxu0 0.0
      %858 = vmatmul.mubr.f32.gmra.mrb[0].mxu0 %v763
      %v859 = vpop.f32.mrb[0].mxu0
      %v860 = vadd.f32 %v328, %v859
      %v861 = vpop.f32.mrb[0].mxu0
      %862 = vmatprep.mubr.f32.mxu0 0.0
      %863 = vmatmul.mubr.f32.gmra.mrb[0].mxu0 %v766
      %v864 = vpop.f32.mrb[0].mxu0
      %v865 = vadd.f32 %v328, %v864
      %v866 = vpop.f32.mrb[0].mxu0
      %867 = vdwg.mxu0
      %v868 = vmax.f32 %v835, 0.0
      %v869 = vmax.f32 %v840, 0.0
      %v870 = vmax.f32 %v845, 0.0
      %v871 = vmax.f32 %v850, 0.0
      %v872 = vmax.f32 %v855, 0.0
      %v873 = vmax.f32 %v860, 0.0
      %v874 = vmax.f32 %v865, 0.0
      %v875 = vmax.f32 %v733, %v868
      %v876 = vmax.f32 %v734, %v869
      %v877 = vmax.f32 %v735, %v870
      %v878 = vmax.f32 %v736, %v871
      %v879 = vmax.f32 %v737, %v872
      %v880 = vmax.f32 %v738, %v873
      %v881 = vmax.f32 %v739, %v874
      %v882 = vmax.f32 %v598, %v875
      %v883 = vmax.f32 %v599, %v876
      %v884 = vmax.f32 %v600, %v877
      %v885 = vmax.f32 %v601, %v878
      %v886 = vmax.f32 %v602, %v879
      %v887 = vmax.f32 %v603, %v880
      %v888 = vmax.f32 %v604, %v881
      %vm889 = vcmask 31744
      %890 = vst.msk [vmem:[%s311] sm:$0xff] %vm889, %v882
      %891 = vst.msk [vmem:[%s311 + $0x8] sm:$0xff] %vm889, %v883
      %892 = vst.msk [vmem:[%s311 + $0x10] sm:$0xff] %vm889, %v884
      %893 = vst.msk [vmem:[%s311 + $0x18] sm:$0xff] %vm889, %v885
      %894 = vst.msk [vmem:[%s311 + $0x20] sm:$0xff] %vm889, %v886
      %895 = vst.msk [vmem:[%s311 + $0x28] sm:$0xff] %vm889, %v887
      %vm896 = vcmask 24576
      %897 = vst.msk [vmem:[%s311 + $0x30] sm:$0x1] %vm896, %v888
      %p898 = scmp.lt.s32.totalorder %s17, 1
      %s899 = scalar_select %p898, %s17, 1
      %s900 = smul.addr %s899, 7
      %s901 = smul.addr %s900, 8
      %s902 = scalar_lea.vmem %s6, %s901
      // Predicated region
      $region45: #{forward.3} parent=43 // pred_check
        %p903 = pneg %p181
      $region46: #{forward.3} parent=43 // pred_check_branch
        %905 = sbr.rel (%p903) target = $region48
      $region47: #{forward.3} parent=43 // pred_region
        _
      $region48: #{forward.3} parent=43 // pred_fallthru
        _
    $region44: #{forward.3} parent=5 // pred_fallthru
      _
    %p906 = scmp.le.s32.totalorder 2, %s12
    // Predicated region
    $region49: #{forward.3} parent=5 // pred_check
      %p907 = pneg %p906
    $region50: #{forward.3} parent=5 // pred_check_branch
      %909 = sbr.rel (%p907) target = $region52
    $region51: #{forward.3} parent=5 // pred_region
      %s910 = ssub.s32 %s12, 2
      // Predicated region
      $region53: #{forward.3} parent=51 // pred_check
        %p911 = pneg %p187
      $region54: #{forward.3} parent=51 // pred_check_branch
        %913 = sbr.rel (%p911) target = $region56
      $region55: #{forward.3} parent=51 // pred_region
        %p914 = scmp.lt.s32.totalorder %s18, 1
        %s915 = scalar_select %p914, %s18, 1
        %s916 = smul.addr %s915, 7
        %s917 = smul.addr %s916, 8
        %s918 = scalar_lea.vmem %s6, %s917
      $region56: #{forward.3} parent=51 // pred_fallthru
        _
    $region52: #{forward.3} parent=5 // pred_fallthru
      _
  $region6: #{forward.3} parent=0 // loop_footer
    %s16 = sadd.s32 1, %s12
  $region7: #{forward.3} parent=0 // loop_footer_branch
    %11 = sbr.rel target = $region3
  $region8: #{forward.3} parent=0 // loop_exit
    _

// kernel: forward.4
$region0: #{forward.4}
  #allocation0 [shape = 'u32[]', space=smem, size = 0x4, offset = 0x4, fixed_abs, tag = 'smem constant byte address 0x4 - core index']
  #allocation1 [shape = 'u32[144,128]{1,0:T(1,128)}', space=vmem, size = 0x12000, scoped, tag = 'internal scratch']
  %s0 = inlined_call_operand.vmem [shape: f32[2,4,36], index: 0, kind: input, shape index: {}]
  %s1 = inlined_call_operand.vmem [shape: f32[2,4,36], index: 1, kind: input, shape index: {}]
  %s2 = inlined_call_operand.vmem [shape: f32[2,4,36], index: 2, kind: input, shape index: {}]
  %s3 = inlined_call_operand.vmem [shape: f32[2,4,36], index: 3, kind: input, shape index: {}]
  %s4 = inlined_call_operand.vmem [shape: f32[36,8], index: 4, kind: input, shape index: {}]
  %s5 = inlined_call_operand.vmem [shape: f32[1,8], index: 5, kind: input, shape index: {}]
  %s6 = inlined_call_operand.vmem [shape: f32[2,4,8], index: 6, kind: output, shape index: {}]
  %s7 = sld [smem:[#allocation0]]
  $region57: #{forward.4} parent=0
    _
  %s9 = ssub.s32 1, %s7
  %s10 = scalar_select 0, %s9, %s7
  loop: start=0, step=1, limit=4
  $region2: #{forward.4} parent=0 // loop_pre_header
    _
  $region3: #{forward.4} parent=0 // loop_header
    %s12 = sphi 0, %s16
    %p13 = scmp.ge.s32.totalorder %s12, 4
    %s22 = sphi 0, %s24
    %s25 = sphi 0, %s22
    %s26 = sphi 0, %s25
    %s42 = sphi 0, %s26
    %s48 = sphi 0, %s50
    %s51 = sphi 0, %s48
    %s52 = sphi 0, %s51
    %s68 = sphi 0, %s52
    %s74 = sphi 0, %s76
    %s77 = sphi 0, %s74
    %s78 = sphi 0, %s77
    %s94 = sphi 0, %s78
    %s100 = sphi 0, %s102
    %s103 = sphi 0, %s100
    %s104 = sphi 0, %s103
    %s120 = sphi 0, %s104
    %s124 = sphi 0, %s124
    %s126 = sphi 0, %s124
    %s127 = sphi 0, %s126
    %s141 = sphi 0, %s127
    %s145 = sphi 0, %s145
    %s147 = sphi 0, %s145
    %s148 = sphi 0, %s147
    %s162 = sphi 0, %s148
    %s168 = sphi 0, %s170
    %s171 = sphi 0, %s168
    %s172 = sphi 0, %s171
    %s188 = sphi 0, %s172
  $region4: #{forward.4} parent=0 // loop_header_branch
    %15 = sbr.rel (%p13) target = $region8
  $region5: #{forward.4} parent=0 // loop_body
    %s17 = ssub.s32 %s12, 1
    %s18 = ssub.s32 %s12, 2
    %s19 = sadd.s32 %s12, 1
    %s20 = ssub.s32 %s12, %s19
    %p21 = scmp.eq.s32.totalorder %s20, 0
    %s23 = sadd.s32 %s22, 1
    %s24 = scalar_select %p21, %s22, %s23
    %p27 = pneg %p21
    %p28 = scmp.eq.s32.totalorder %s12, 1
    %p29 = por %p27, %p28
    %p30 = scmp.ne.s32.totalorder %s22, %s25
    %p31 = scmp.eq.s32.totalorder %s12, 0
    %p32 = por %p30, %p31
    %p33 = scmp.ne.s32.totalorder %s22, %s25
    %p34 = scmp.eq.s32.totalorder %s17, 1
    %p35 = por %p33, %p34
    %p36 = scmp.ne.s32.totalorder %s25, %s26
    %p37 = scmp.eq.s32.totalorder %s17, 0
    %p38 = por %p36, %p37
    %p39 = scmp.ne.s32.totalorder %s25, %s26
    %p40 = scmp.eq.s32.totalorder %s18, 1
    %p41 = por %p39, %p40
    %p43 = scmp.ne.s32.totalorder %s26, %s42
    %p44 = scmp.eq.s32.totalorder %s18, 0
    %p45 = por %p43, %p44
    %s46 = ssub.s32 %s12, %s19
    %p47 = scmp.eq.s32.totalorder %s46, 0
    %s49 = sadd.s32 %s48, 1
    %s50 = scalar_select %p47, %s48, %s49
    %p53 = pneg %p47
    %p54 = scmp.eq.s32.totalorder %s12, 1
    %p55 = por %p53, %p54
    %p56 = scmp.ne.s32.totalorder %s48, %s51
    %p57 = scmp.eq.s32.totalorder %s12, 0
    %p58 = por %p56, %p57
    %p59 = scmp.ne.s32.totalorder %s48, %s51
    %p60 = scmp.eq.s32.totalorder %s17, 1
    %p61 = por %p59, %p60
    %p62 = scmp.ne.s32.totalorder %s51, %s52
    %p63 = scmp.eq.s32.totalorder %s17, 0
    %p64 = por %p62, %p63
    %p65 = scmp.ne.s32.totalorder %s51, %s52
    %p66 = scmp.eq.s32.totalorder %s18, 1
    %p67 = por %p65, %p66
    %p69 = scmp.ne.s32.totalorder %s52, %s68
    %p70 = scmp.eq.s32.totalorder %s18, 0
    %p71 = por %p69, %p70
    %s72 = ssub.s32 %s12, %s19
    %p73 = scmp.eq.s32.totalorder %s72, 0
    %s75 = sadd.s32 %s74, 1
    %s76 = scalar_select %p73, %s74, %s75
    %p79 = pneg %p73
    %p80 = scmp.eq.s32.totalorder %s12, 1
    %p81 = por %p79, %p80
    %p82 = scmp.ne.s32.totalorder %s74, %s77
    %p83 = scmp.eq.s32.totalorder %s12, 0
    %p84 = por %p82, %p83
    %p85 = scmp.ne.s32.totalorder %s74, %s77
    %p86 = scmp.eq.s32.totalorder %s17, 1
    %p87 = por %p85, %p86
    %p88 = scmp.ne.s32.totalorder %s77, %s78
    %p89 = scmp.eq.s32.totalorder %s17, 0
    %p90 = por %p88, %p89
    %p91 = scmp.ne.s32.totalorder %s77, %s78
    %p92 = scmp.eq.s32.totalorder %s18, 1
    %p93 = por %p91, %p92
    %p95 = scmp.ne.s32.totalorder %s78, %s94
    %p96 = scmp.eq.s32.totalorder %s18, 0
    %p97 = por %p95, %p96
    %s98 = ssub.s32 %s12, %s19
    %p99 = scmp.eq.s32.totalorder %s98, 0
    %s101 = sadd.s32 %s100, 1
    %s102 = scalar_select %p99, %s100, %s101
    %p105 = pneg %p99
    %p106 = scmp.eq.s32.totalorder %s12, 1
    %p107 = por %p105, %p106
    %p108 = scmp.ne.s32.totalorder %s100, %s103
    %p109 = scmp.eq.s32.totalorder %s12, 0
    %p110 = por %p108, %p109
    %p111 = scmp.ne.s32.totalorder %s100, %s103
    %p112 = scmp.eq.s32.totalorder %s17, 1
    %p113 = por %p111, %p112
    %p114 = scmp.ne.s32.totalorder %s103, %s104
    %p115 = scmp.eq.s32.totalorder %s17, 0
    %p116 = por %p114, %p115
    %p117 = scmp.ne.s32.totalorder %s103, %s104
    %p118 = scmp.eq.s32.totalorder %s18, 1
    %p119 = por %p117, %p118
    %p121 = scmp.ne.s32.totalorder %s104, %s120
    %p122 = scmp.eq.s32.totalorder %s18, 0
    %p123 = por %p121, %p122
    %s125 = sadd.s32 %s124, 1
    %p128 = scmp.eq.s32.totalorder %s12, 1
    %p129 = scmp.ne.s32.totalorder %s124, %s126
    %p130 = scmp.eq.s32.totalorder %s12, 0
    %p131 = por %p129, %p130
    %p132 = scmp.ne.s32.totalorder %s124, %s126
    %p133 = scmp.eq.s32.totalorder %s17, 1
    %p134 = por %p132, %p133
    %p135 = scmp.ne.s32.totalorder %s126, %s127
    %p136 = scmp.eq.s32.totalorder %s17, 0
    %p137 = por %p135, %p136
    %p138 = scmp.ne.s32.totalorder %s126, %s127
    %p139 = scmp.eq.s32.totalorder %s18, 1
    %p140 = por %p138, %p139
    %p142 = scmp.ne.s32.totalorder %s127, %s141
    %p143 = scmp.eq.s32.totalorder %s18, 0
    %p144 = por %p142, %p143
    %s146 = sadd.s32 %s145, 1
    %p149 = scmp.eq.s32.totalorder %s12, 1
    %p150 = scmp.ne.s32.totalorder %s145, %s147
    %p151 = scmp.eq.s32.totalorder %s12, 0
    %p152 = por %p150, %p151
    %p153 = scmp.ne.s32.totalorder %s145, %s147
    %p154 = scmp.eq.s32.totalorder %s17, 1
    %p155 = por %p153, %p154
    %p156 = scmp.ne.s32.totalorder %s147, %s148
    %p157 = scmp.eq.s32.totalorder %s17, 0
    %p158 = por %p156, %p157
    %p159 = scmp.ne.s32.totalorder %s147, %s148
    %p160 = scmp.eq.s32.totalorder %s18, 1
    %p161 = por %p159, %p160
    %p163 = scmp.ne.s32.totalorder %s148, %s162
    %p164 = scmp.eq.s32.totalorder %s18, 0
    %p165 = por %p163, %p164
    %s166 = ssub.s32 %s12, %s19
    %p167 = scmp.eq.s32.totalorder %s166, 0
    %s169 = sadd.s32 %s168, 1
    %s170 = scalar_select %p167, %s168, %s169
    %p173 = pneg %p167
    %p174 = scmp.eq.s32.totalorder %s12, 1
    %p175 = por %p173, %p174
    %p176 = scmp.ne.s32.totalorder %s168, %s171
    %p177 = scmp.eq.s32.totalorder %s12, 0
    %p178 = por %p176, %p177
    %p179 = scmp.ne.s32.totalorder %s168, %s171
    %p180 = scmp.eq.s32.totalorder %s17, 1
    %p181 = por %p179, %p180
    %p182 = scmp.ne.s32.totalorder %s171, %s172
    %p183 = scmp.eq.s32.totalorder %s17, 0
    %p184 = por %p182, %p183
    %p185 = scmp.ne.s32.totalorder %s171, %s172
    %p186 = scmp.eq.s32.totalorder %s18, 1
    %p187 = por %p185, %p186
    %p189 = scmp.ne.s32.totalorder %s172, %s188
    %p190 = scmp.eq.s32.totalorder %s18, 0
    %p191 = por %p189, %p190
    %p192 = scmp.le.s32.totalorder 1, %s12
    %p193 = scmp.lt.s32.totalorder %s12, 3
    %p194 = pnand %p192, %p193
    %p195 = pneg %p194
    // Predicated region
    $region9: #{forward.4} parent=5 // pred_check
      _
    $region10: #{forward.4} parent=5 // pred_check_branch
      %197 = sbr.rel (%p194) target = $region12
    $region11: #{forward.4} parent=5 // pred_region
      %s198 = ssub.s32 %s12, 1
      // Predicated region
      $region13: #{forward.4} parent=11 // pred_check
        %p199 = pneg %p137
      $region14: #{forward.4} parent=11 // pred_check_branch
        %201 = sbr.rel (%p199) target = $region16
      $region15: #{forward.4} parent=11 // pred_region
        _
      $region16: #{forward.4} parent=11 // pred_fallthru
        _
      // Predicated region
      $region17: #{forward.4} parent=11 // pred_check
        %p202 = pneg %p158
      $region18: #{forward.4} parent=11 // pred_check_branch
        %204 = sbr.rel (%p202) target = $region20
      $region19: #{forward.4} parent=11 // pred_region
        _
      $region20: #{forward.4} parent=11 // pred_fallthru
        _
    $region12: #{forward.4} parent=5 // pred_fallthru
      _
    %p205 = scmp.lt.s32.totalorder %s12, 2
    // Predicated region
    $region21: #{forward.4} parent=5 // pred_check
      %p206 = pneg %p205
    $region22: #{forward.4} parent=5 // pred_check_branch
      %208 = sbr.rel (%p206) target = $region24
    $region23: #{forward.4} parent=5 // pred_region
      // Predicated region
      $region25: #{forward.4} parent=23 // pred_check
        %p209 = pneg %p32
      $region26: #{forward.4} parent=23 // pred_check_branch
        %211 = sbr.rel (%p209) target = $region28
      $region27: #{forward.4} parent=23 // pred_region
        %p212 = scmp.lt.s32.totalorder %s12, 1
        %s213 = scalar_select %p212, %s12, 1
        %s214 = smul.addr %s213, 4
        %s215 = scalar_lea.vmem %s0, %s214
      $region28: #{forward.4} parent=23 // pred_fallthru
        _
      // Predicated region
      $region29: #{forward.4} parent=23 // pred_check
        %p216 = pneg %p58
      $region30: #{forward.4} parent=23 // pred_check_branch
        %218 = sbr.rel (%p216) target = $region32
      $region31: #{forward.4} parent=23 // pred_region
        %p219 = scmp.lt.s32.totalorder %s12, 1
        %s220 = scalar_select %p219, %s12, 1
        %s221 = smul.addr %s220, 4
        %s222 = scalar_lea.vmem %s1, %s221
      $region32: #{forward.4} parent=23 // pred_fallthru
        _
      // Predicated region
      $region33: #{forward.4} parent=23 // pred_check
        %p223 = pneg %p84
      $region34: #{forward.4} parent=23 // pred_check_branch
        %225 = sbr.rel (%p223) target = $region36
      $region35: #{forward.4} parent=23 // pred_region
        %p226 = scmp.lt.s32.totalorder %s12, 1
        %s227 = scalar_select %p226, %s12, 1
        %s228 = smul.addr %s227, 4
        %s229 = scalar_lea.vmem %s2, %s228
      $region36: #{forward.4} parent=23 // pred_fallthru
        _
      // Predicated region
      $region37: #{forward.4} parent=23 // pred_check
        %p230 = pneg %p110
      $region38: #{forward.4} parent=23 // pred_check_branch
        %232 = sbr.rel (%p230) target = $region40
      $region39: #{forward.4} parent=23 // pred_region
        %p233 = scmp.lt.s32.totalorder %s12, 1
        %s234 = scalar_select %p233, %s12, 1
        %s235 = smul.addr %s234, 4
        %s236 = scalar_lea.vmem %s3, %s235
      $region40: #{forward.4} parent=23 // pred_fallthru
        _
    $region24: #{forward.4} parent=5 // pred_fallthru
      _
    %p237 = scmp.le.s32.totalorder 1, %s12
    %p238 = scmp.lt.s32.totalorder %s12, 3
    %p239 = pnand %p237, %p238
    %p240 = pneg %p239
    // Predicated region
    $region41: #{forward.4} parent=5 // pred_check
      _
    $region42: #{forward.4} parent=5 // pred_check_branch
      %242 = sbr.rel (%p239) target = $region44
    $region43: #{forward.4} parent=5 // pred_region
      %s243 = ssub.s32 %s12, 1
      %p244 = scmp.lt.s32.totalorder %s17, 1
      %s245 = scalar_select %p244, %s17, 1
      %s246 = smul.addr %s245, 4
      %s247 = scalar_lea.vmem %s0, %s246
      %p248 = pneg %p38
      %p249 = pneg %p35
      %p250 = scmp.lt.s32.totalorder %s17, 1
      %s251 = scalar_select %p250, %s17, 1
      %s252 = smul.addr %s251, 4
      %s253 = scalar_lea.vmem %s1, %s252
      %p254 = pneg %p64
      %p255 = pneg %p61
      %p256 = scmp.lt.s32.totalorder %s17, 1
      %s257 = scalar_select %p256, %s17, 1
      %s258 = smul.addr %s257, 4
      %s259 = scalar_lea.vmem %s2, %s258
      %p260 = pneg %p90
      %p261 = pneg %p87
      %p262 = scmp.lt.s32.totalorder %s17, 1
      %s263 = scalar_select %p262, %s17, 1
      %s264 = smul.addr %s263, 4
      %s265 = scalar_lea.vmem %s3, %s264
      %p266 = pneg %p116
      %p267 = pneg %p113
      %p268 = pneg %p137
      %p269 = pneg %p134
      %p270 = pneg %p158
      %p271 = pneg %p155
      %p272 = pneg %p184
      %p273 = pneg %p181
      %p274 = scmp.lt.s32.totalorder %s17, 1
      %s275 = scalar_select %p274, %s17, 1
      %s276 = smul.addr %s275, 4
      %s277 = scalar_lea.vmem %s6, %s276
      %p278 = scmp.lt.s32.totalorder %s17, 1
      %s279 = scalar_select %p278, %s17, 1
      %s280 = smul.addr %s279, 4
      %s281 = scalar_lea.vmem %s0, %s280
      %p282 = scmp.lt.s32.totalorder %s17, 1
      %s283 = scalar_select %p282, %s17, 1
      %s284 = smul.addr %s283, 4
      %s285 = scalar_lea.vmem %s1, %s284
      %p286 = scmp.lt.s32.totalorder %s17, 1
      %s287 = scalar_select %p286, %s17, 1
      %s288 = smul.addr %s287, 4
      %s289 = scalar_lea.vmem %s2, %s288
      %p290 = scmp.lt.s32.totalorder %s17, 1
      %s291 = scalar_select %p290, %s17, 1
      %s292 = smul.addr %s291, 4
      %s293 = scalar_lea.vmem %s3, %s292
      %p294 = scmp.lt.s32.totalorder %s17, 1
      %s295 = scalar_select %p294, %s17, 1
      %s296 = smul.addr %s295, 4
      %s297 = scalar_lea.vmem %s6, %s296
      %v298 = vld [vmem:[%s4] sm:$0xff]
      %v299 = vld [vmem:[%s4 + $0x8] sm:$0xff]
      %v300 = vld [vmem:[%s4 + $0x10] sm:$0xff]
      %v301 = vld [vmem:[%s4 + $0x18] sm:$0xff]
      %v302 = vld [vmem:[%s4 + $0x20] sm:$0xf]
      %v303 = vld [vmem:[%s5] sm:$0x1]
      %v304 = vld [vmem:[%s281] sm:$0xf]
      %v306 = vlaneseq
      %v307 = vshrl.u32 %v306, 7
      %v308 = vsub.s32 0, %v307
      %v309 = vrot.slane %v303, %v308
      %vm311 = vcmask 293888
      %v313 = vsel %vm311, %v304, 0
      %vm315 = vcmask 1043456
      %v317 = vsel %vm315, %v302, 0
      %319 = vmatprep.subr.mxu0 0.0
      %320 = vmatpush1.msra.mxu0 %v298
      %321 = vmatprep.subr.mxu0 0.0
      %322 = vmatpush1.msra.mxu0 %v299
      %323 = vmatprep.subr.mxu0 0.0
      %324 = vmatpush1.msra.mxu0 %v300
      %325 = vmatprep.subr.mxu0 0.0
      %326 = vmatpush1.msra.mxu0 %v301
      %327 = vmatprep.subr.mxu0 0.0
      %328 = vmatpush1.msra.mxu0 %v317
      %329 = vmatprep.subr.mxu0 0.0
      %330 = vmatpush1.msra.mxu0 0.0
      %331 = vmatprep.subr.mxu0 0.0
      %332 = vmatpush1.msra.mxu0 0.0
      %333 = vmatprep.subr.mxu0 0.0
      %334 = vmatpush1.msra.mxu0 0.0
      %335 = vmatprep.subr.mxu0 0.0
      %336 = vmatpush1.msra.mxu0 0.0
      %337 = vmatprep.subr.mxu0 0.0
      %338 = vmatpush1.msra.mxu0 0.0
      %339 = vmatprep.subr.mxu0 0.0
      %340 = vmatpush1.msra.mxu0 0.0
      %341 = vmatprep.subr.mxu0 0.0
      %342 = vmatpush1.msra.mxu0 0.0
      %343 = vmatprep.subr.mxu0 0.0
      %344 = vmatpush1.msra.mxu0 0.0
      %345 = vmatprep.subr.mxu0 0.0
      %346 = vmatpush1.msra.mxu0 0.0
      %347 = vmatprep.subr.mxu0 0.0
      %348 = vmatpush1.msra.mxu0 0.0
      %349 = vmatprep.subr.mxu0 0.0
      %350 = vmatpush1.msra.mxu0 0.0
      %351 = vmatprep.subr.mxu0 0.0
      %352 = vmatpush1.msra.mxu0 0.0
      %353 = vmatprep.subr.mxu0 0.0
      %354 = vmatpush1.msra.mxu0 0.0
      %355 = vmatprep.subr.mxu0 0.0
      %356 = vmatpush1.msra.mxu0 0.0
      %357 = vmatprep.subr.mxu0 0.0
      %358 = vmatpush1.msra.mxu0 0.0
      %359 = vmatprep.subr.mxu0 0.0
      %360 = vmatpush1.msra.mxu0 0.0
      %361 = vmatprep.subr.mxu0 0.0
      %362 = vmatpush1.msra.mxu0 0.0
      %363 = vmatprep.subr.mxu0 0.0
      %364 = vmatpush1.msra.mxu0 0.0
      %365 = vmatprep.subr.mxu0 0.0
      %366 = vmatpush1.msra.mxu0 0.0
      %367 = vmatprep.subr.mxu0 0.0
      %368 = vmatpush1.msra.mxu0 0.0
      %369 = vmatprep.subr.mxu0 0.0
      %370 = vmatpush1.msra.mxu0 0.0
      %371 = vmatprep.subr.mxu0 0.0
      %372 = vmatpush1.msra.mxu0 0.0
      %373 = vmatprep.subr.mxu0 0.0
      %374 = vmatpush1.msra.mxu0 0.0
      %375 = vmatprep.subr.mxu0 0.0
      %376 = vmatpush1.msra.mxu0 0.0
      %377 = vmatprep.subr.mxu0 0.0
      %378 = vmatpush1.msra.mxu0 0.0
      %379 = vmatprep.subr.mxu0 0.0
      %380 = vmatpush1.msra.mxu0 0.0
      %381 = vmatprep.subr.mxu0 0.0
      %382 = vmatpush1.msra.mxu0 0.0
      %383 = vmatprep.mubr.f32.mxu0 0.0
      %384 = vmatmul.mubr.f32.gmra.mrb[0].mxu0 %v313
      %v385 = vpop.f32.mrb[0].mxu0
      %v386 = vadd.f32 %v309, %v385
      %v387 = vpop.f32.mrb[0].mxu0
      %388 = vdwg.mxu0
      %v389 = vmax.f32 %v386, 0.0
      %v390 = vld [vmem:[%s285] sm:$0xf]
      %v392 = vsel %vm311, %v390, 0
      %394 = vmatprep.subr.mxu0 0.0
      %395 = vmatpush1.msra.mxu0 %v298
      %396 = vmatprep.subr.mxu0 0.0
      %397 = vmatpush1.msra.mxu0 %v299
      %398 = vmatprep.subr.mxu0 0.0
      %399 = vmatpush1.msra.mxu0 %v300
      %400 = vmatprep.subr.mxu0 0.0
      %401 = vmatpush1.msra.mxu0 %v301
      %402 = vmatprep.subr.mxu0 0.0
      %403 = vmatpush1.msra.mxu0 %v317
      %404 = vmatprep.subr.mxu0 0.0
      %405 = vmatpush1.msra.mxu0 0.0
      %406 = vmatprep.subr.mxu0 0.0
      %407 = vmatpush1.msra.mxu0 0.0
      %408 = vmatprep.subr.mxu0 0.0
      %409 = vmatpush1.msra.mxu0 0.0
      %410 = vmatprep.subr.mxu0 0.0
      %411 = vmatpush1.msra.mxu0 0.0
      %412 = vmatprep.subr.mxu0 0.0
      %413 = vmatpush1.msra.mxu0 0.0
      %414 = vmatprep.subr.mxu0 0.0
      %415 = vmatpush1.msra.mxu0 0.0
      %416 = vmatprep.subr.mxu0 0.0
      %417 = vmatpush1.msra.mxu0 0.0
      %418 = vmatprep.subr.mxu0 0.0
      %419 = vmatpush1.msra.mxu0 0.0
      %420 = vmatprep.subr.mxu0 0.0
      %421 = vmatpush1.msra.mxu0 0.0
      %422 = vmatprep.subr.mxu0 0.0
      %423 = vmatpush1.msra.mxu0 0.0
      %424 = vmatprep.subr.mxu0 0.0
      %425 = vmatpush1.msra.mxu0 0.0
      %426 = vmatprep.subr.mxu0 0.0
      %427 = vmatpush1.msra.mxu0 0.0
      %428 = vmatprep.subr.mxu0 0.0
      %429 = vmatpush1.msra.mxu0 0.0
      %430 = vmatprep.subr.mxu0 0.0
      %431 = vmatpush1.msra.mxu0 0.0
      %432 = vmatprep.subr.mxu0 0.0
      %433 = vmatpush1.msra.mxu0 0.0
      %434 = vmatprep.subr.mxu0 0.0
      %435 = vmatpush1.msra.mxu0 0.0
      %436 = vmatprep.subr.mxu0 0.0
      %437 = vmatpush1.msra.mxu0 0.0
      %438 = vmatprep.subr.mxu0 0.0
      %439 = vmatpush1.msra.mxu0 0.0
      %440 = vmatprep.subr.mxu0 0.0
      %441 = vmatpush1.msra.mxu0 0.0
      %442 = vmatprep.subr.mxu0 0.0
      %443 = vmatpush1.msra.mxu0 0.0
      %444 = vmatprep.subr.mxu0 0.0
      %445 = vmatpush1.msra.mxu0 0.0
      %446 = vmatprep.subr.mxu0 0.0
      %447 = vmatpush1.msra.mxu0 0.0
      %448 = vmatprep.subr.mxu0 0.0
      %449 = vmatpush1.msra.mxu0 0.0
      %450 = vmatprep.subr.mxu0 0.0
      %451 = vmatpush1.msra.mxu0 0.0
      %452 = vmatprep.subr.mxu0 0.0
      %453 = vmatpush1.msra.mxu0 0.0
      %454 = vmatprep.subr.mxu0 0.0
      %455 = vmatpush1.msra.mxu0 0.0
      %456 = vmatprep.subr.mxu0 0.0
      %457 = vmatpush1.msra.mxu0 0.0
      %458 = vmatprep.mubr.f32.mxu0 0.0
      %459 = vmatmul.mubr.f32.gmra.mrb[0].mxu0 %v392
      %v460 = vpop.f32.mrb[0].mxu0
      %v461 = vadd.f32 %v309, %v460
      %v462 = vpop.f32.mrb[0].mxu0
      %463 = vdwg.mxu0
      %v464 = vmax.f32 %v461, 0.0
      %v465 = vmax.f32 %v389, %v464
      %v466 = vld [vmem:[%s289] sm:$0xf]
      %v468 = vsel %vm311, %v466, 0
      %470 = vmatprep.subr.mxu0 0.0
      %471 = vmatpush1.msra.mxu0 %v298
      %472 = vmatprep.subr.mxu0 0.0
      %473 = vmatpush1.msra.mxu0 %v299
      %474 = vmatprep.subr.mxu0 0.0
      %475 = vmatpush1.msra.mxu0 %v300
      %476 = vmatprep.subr.mxu0 0.0
      %477 = vmatpush1.msra.mxu0 %v301
      %478 = vmatprep.subr.mxu0 0.0
      %479 = vmatpush1.msra.mxu0 %v317
      %480 = vmatprep.subr.mxu0 0.0
      %481 = vmatpush1.msra.mxu0 0.0
      %482 = vmatprep.subr.mxu0 0.0
      %483 = vmatpush1.msra.mxu0 0.0
      %484 = vmatprep.subr.mxu0 0.0
      %485 = vmatpush1.msra.mxu0 0.0
      %486 = vmatprep.subr.mxu0 0.0
      %487 = vmatpush1.msra.mxu0 0.0
      %488 = vmatprep.subr.mxu0 0.0
      %489 = vmatpush1.msra.mxu0 0.0
      %490 = vmatprep.subr.mxu0 0.0
      %491 = vmatpush1.msra.mxu0 0.0
      %492 = vmatprep.subr.mxu0 0.0
      %493 = vmatpush1.msra.mxu0 0.0
      %494 = vmatprep.subr.mxu0 0.0
      %495 = vmatpush1.msra.mxu0 0.0
      %496 = vmatprep.subr.mxu0 0.0
      %497 = vmatpush1.msra.mxu0 0.0
      %498 = vmatprep.subr.mxu0 0.0
      %499 = vmatpush1.msra.mxu0 0.0
      %500 = vmatprep.subr.mxu0 0.0
      %501 = vmatpush1.msra.mxu0 0.0
      %502 = vmatprep.subr.mxu0 0.0
      %503 = vmatpush1.msra.mxu0 0.0
      %504 = vmatprep.subr.mxu0 0.0
      %505 = vmatpush1.msra.mxu0 0.0
      %506 = vmatprep.subr.mxu0 0.0
      %507 = vmatpush1.msra.mxu0 0.0
      %508 = vmatprep.subr.mxu0 0.0
      %509 = vmatpush1.msra.mxu0 0.0
      %510 = vmatprep.subr.mxu0 0.0
      %511 = vmatpush1.msra.mxu0 0.0
      %512 = vmatprep.subr.mxu0 0.0
      %513 = vmatpush1.msra.mxu0 0.0
      %514 = vmatprep.subr.mxu0 0.0
      %515 = vmatpush1.msra.mxu0 0.0
      %516 = vmatprep.subr.mxu0 0.0
      %517 = vmatpush1.msra.mxu0 0.0
      %518 = vmatprep.subr.mxu0 0.0
      %519 = vmatpush1.msra.mxu0 0.0
      %520 = vmatprep.subr.mxu0 0.0
      %521 = vmatpush1.msra.mxu0 0.0
      %522 = vmatprep.subr.mxu0 0.0
      %523 = vmatpush1.msra.mxu0 0.0
      %524 = vmatprep.subr.mxu0 0.0
      %525 = vmatpush1.msra.mxu0 0.0
      %526 = vmatprep.subr.mxu0 0.0
      %527 = vmatpush1.msra.mxu0 0.0
      %528 = vmatprep.subr.mxu0 0.0
      %529 = vmatpush1.msra.mxu0 0.0
      %530 = vmatprep.subr.mxu0 0.0
      %531 = vmatpush1.msra.mxu0 0.0
      %532 = vmatprep.subr.mxu0 0.0
      %533 = vmatpush1.msra.mxu0 0.0
      %534 = vmatprep.mubr.f32.mxu0 0.0
      %535 = vmatmul.mubr.f32.gmra.mrb[0].mxu0 %v468
      %v536 = vpop.f32.mrb[0].mxu0
      %v537 = vadd.f32 %v309, %v536
      %v538 = vpop.f32.mrb[0].mxu0
      %539 = vdwg.mxu0
      %v540 = vmax.f32 %v537, 0.0
      %v541 = vld [vmem:[%s293] sm:$0xf]
      %v543 = vsel %vm311, %v541, 0
      %545 = vmatprep.subr.mxu0 0.0
      %546 = vmatpush1.msra.mxu0 %v298
      %547 = vmatprep.subr.mxu0 0.0
      %548 = vmatpush1.msra.mxu0 %v299
      %549 = vmatprep.subr.mxu0 0.0
      %550 = vmatpush1.msra.mxu0 %v300
      %551 = vmatprep.subr.mxu0 0.0
      %552 = vmatpush1.msra.mxu0 %v301
      %553 = vmatprep.subr.mxu0 0.0
      %554 = vmatpush1.msra.mxu0 %v317
      %555 = vmatprep.subr.mxu0 0.0
      %556 = vmatpush1.msra.mxu0 0.0
      %557 = vmatprep.subr.mxu0 0.0
      %558 = vmatpush1.msra.mxu0 0.0
      %559 = vmatprep.subr.mxu0 0.0
      %560 = vmatpush1.msra.mxu0 0.0
      %561 = vmatprep.subr.mxu0 0.0
      %562 = vmatpush1.msra.mxu0 0.0
      %563 = vmatprep.subr.mxu0 0.0
      %564 = vmatpush1.msra.mxu0 0.0
      %565 = vmatprep.subr.mxu0 0.0
      %566 = vmatpush1.msra.mxu0 0.0
      %567 = vmatprep.subr.mxu0 0.0
      %568 = vmatpush1.msra.mxu0 0.0
      %569 = vmatprep.subr.mxu0 0.0
      %570 = vmatpush1.msra.mxu0 0.0
      %571 = vmatprep.subr.mxu0 0.0
      %572 = vmatpush1.msra.mxu0 0.0
      %573 = vmatprep.subr.mxu0 0.0
      %574 = vmatpush1.msra.mxu0 0.0
      %575 = vmatprep.subr.mxu0 0.0
      %576 = vmatpush1.msra.mxu0 0.0
      %577 = vmatprep.subr.mxu0 0.0
      %578 = vmatpush1.msra.mxu0 0.0
      %579 = vmatprep.subr.mxu0 0.0
      %580 = vmatpush1.msra.mxu0 0.0
      %581 = vmatprep.subr.mxu0 0.0
      %582 = vmatpush1.msra.mxu0 0.0
      %583 = vmatprep.subr.mxu0 0.0
      %584 = vmatpush1.msra.mxu0 0.0
      %585 = vmatprep.subr.mxu0 0.0
      %586 = vmatpush1.msra.mxu0 0.0
      %587 = vmatprep.subr.mxu0 0.0
      %588 = vmatpush1.msra.mxu0 0.0
      %589 = vmatprep.subr.mxu0 0.0
      %590 = vmatpush1.msra.mxu0 0.0
      %591 = vmatprep.subr.mxu0 0.0
      %592 = vmatpush1.msra.mxu0 0.0
      %593 = vmatprep.subr.mxu0 0.0
      %594 = vmatpush1.msra.mxu0 0.0
      %595 = vmatprep.subr.mxu0 0.0
      %596 = vmatpush1.msra.mxu0 0.0
      %597 = vmatprep.subr.mxu0 0.0
      %598 = vmatpush1.msra.mxu0 0.0
      %599 = vmatprep.subr.mxu0 0.0
      %600 = vmatpush1.msra.mxu0 0.0
      %601 = vmatprep.subr.mxu0 0.0
      %602 = vmatpush1.msra.mxu0 0.0
      %603 = vmatprep.subr.mxu0 0.0
      %604 = vmatpush1.msra.mxu0 0.0
      %605 = vmatprep.subr.mxu0 0.0
      %606 = vmatpush1.msra.mxu0 0.0
      %607 = vmatprep.subr.mxu0 0.0
      %608 = vmatpush1.msra.mxu0 0.0
      %609 = vmatprep.mubr.f32.mxu0 0.0
      %610 = vmatmul.mubr.f32.gmra.mrb[0].mxu0 %v543
      %v611 = vpop.f32.mrb[0].mxu0
      %v612 = vadd.f32 %v309, %v611
      %v613 = vpop.f32.mrb[0].mxu0
      %614 = vdwg.mxu0
      %v615 = vmax.f32 %v612, 0.0
      %v616 = vmax.f32 %v540, %v615
      %v617 = vmax.f32 %v465, %v616
      %vm618 = vcmask 60416
      %619 = vst.msk [vmem:[%s297] sm:$0xf] %vm618, %v617
      %p620 = scmp.lt.s32.totalorder %s17, 1
      %s621 = scalar_select %p620, %s17, 1
      %s622 = smul.addr %s621, 4
      %s623 = scalar_lea.vmem %s6, %s622
      // Predicated region
      $region45: #{forward.4} parent=43 // pred_check
        %p624 = pneg %p181
      $region46: #{forward.4} parent=43 // pred_check_branch
        %626 = sbr.rel (%p624) target = $region48
      $region47: #{forward.4} parent=43 // pred_region
        _
      $region48: #{forward.4} parent=43 // pred_fallthru
        _
    $region44: #{forward.4} parent=5 // pred_fallthru
      _
    %p627 = scmp.le.s32.totalorder 2, %s12
    // Predicated region
    $region49: #{forward.4} parent=5 // pred_check
      %p628 = pneg %p627
    $region50: #{forward.4} parent=5 // pred_check_branch
      %630 = sbr.rel (%p628) target = $region52
    $region51: #{forward.4} parent=5 // pred_region
      %s631 = ssub.s32 %s12, 2
      // Predicated region
      $region53: #{forward.4} parent=51 // pred_check
        %p632 = pneg %p187
      $region54: #{forward.4} parent=51 // pred_check_branch
        %634 = sbr.rel (%p632) target = $region56
      $region55: #{forward.4} parent=51 // pred_region
        %p635 = scmp.lt.s32.totalorder %s18, 1
        %s636 = scalar_select %p635, %s18, 1
        %s637 = smul.addr %s636, 4
        %s638 = scalar_lea.vmem %s6, %s637
      $region56: #{forward.4} parent=51 // pred_fallthru
        _
    $region52: #{forward.4} parent=5 // pred_fallthru
      _
  $region6: #{forward.4} parent=0 // loop_footer
    %s16 = sadd.s32 1, %s12
  $region7: #{forward.4} parent=0 // loop_footer_branch
    %11 = sbr.rel target = $region3
  $region8: #{forward.4} parent=0 // loop_exit
    _

// kernel: forward.5
$region0: #{forward.5}
  #allocation0 [shape = 'u32[]', space=smem, size = 0x4, offset = 0x4, fixed_abs, tag = 'smem constant byte address 0x4 - core index']
  #allocation1 [shape = 'u32[144,128]{1,0:T(1,128)}', space=vmem, size = 0x12000, scoped, tag = 'internal scratch']
  %s0 = inlined_call_operand.vmem [shape: f32[2,32], index: 0, kind: input, shape index: {}]
  %s1 = inlined_call_operand.vmem [shape: f32[32,16], index: 1, kind: input, shape index: {}]
  %s2 = inlined_call_operand.vmem [shape: f32[1,16], index: 2, kind: input, shape index: {}]
  %s3 = inlined_call_operand.vmem [shape: f32[2,8], index: 3, kind: input, shape index: {}]
  %s4 = inlined_call_operand.vmem [shape: f32[8,12], index: 4, kind: input, shape index: {}]
  %s5 = inlined_call_operand.vmem [shape: f32[1,12], index: 5, kind: input, shape index: {}]
  %s6 = inlined_call_operand.vmem [shape: f32[12,16], index: 6, kind: input, shape index: {}]
  %s7 = inlined_call_operand.vmem [shape: f32[1,16], index: 7, kind: input, shape index: {}]
  %s8 = inlined_call_operand.vmem [shape: f32[16,5], index: 8, kind: input, shape index: {}]
  %s9 = inlined_call_operand.vmem [shape: f32[16,5], index: 9, kind: input, shape index: {}]
  %s10 = inlined_call_operand.vmem [shape: f32[1,5], index: 10, kind: input, shape index: {}]
  %s11 = inlined_call_operand.hbm [shape: f32[2,5], index: 11, kind: output, shape index: {0}]
  %s12 = inlined_call_operand.hbm [shape: f32[2,5], index: 12, kind: output, shape index: {1}]
  %13 = xla_tuple %s11, %s12
  %s14 = sld [smem:[#allocation0]]
  $region62: #{forward.5} parent=0
    _
  %s16 = ssub.s32 1, %s14
  %s17 = scalar_select 0, %s16, %s14
  $region1: #{forward.5} parent=0
    #allocation2 [shape = 'u8[1024]{0}', space=vmem, size = 0x400, scoped, tag = 'output window, operand 0, single buffered']
    #allocation3 [shape = 's32[1]{0}', space=sflag, size = 0x4, scoped, tag = 'scoped memory for forward.5']
    #allocation4 [shape = 'u8[1024]{0}', space=vmem, size = 0x400, scoped, tag = 'output window, operand 1, single buffered']
    #allocation5 [shape = 's32[1]{0}', space=sflag, size = 0x4, scoped, tag = 'scoped memory for forward.5']
    %18 = vsyncpa [#allocation3], 0
    %19 = vsyncpa [#allocation5], 0
    // Predicated region
    $region2: #{forward.5} parent=1 // pred_check
      _
    $region3: #{forward.5} parent=1 // pred_check_branch
      %21 = sbr.rel (0) target = $region5
    $region4: #{forward.5} parent=1 // pred_region
      _
    $region5: #{forward.5} parent=1 // pred_fallthru
      _
    // Predicated region
    $region6: #{forward.5} parent=1 // pred_check
      _
    $region7: #{forward.5} parent=1 // pred_check_branch
      %23 = sbr.rel (0) target = $region9
    $region8: #{forward.5} parent=1 // pred_region
      _
    $region9: #{forward.5} parent=1 // pred_fallthru
      _
    // Predicated region
    $region10: #{forward.5} parent=1 // pred_check
      _
    $region11: #{forward.5} parent=1 // pred_check_branch
      %25 = sbr.rel (0) target = $region13
    $region12: #{forward.5} parent=1 // pred_region
      _
    $region13: #{forward.5} parent=1 // pred_fallthru
      _
    // Predicated region
    $region14: #{forward.5} parent=1 // pred_check
      _
    $region15: #{forward.5} parent=1 // pred_check_branch
      %27 = sbr.rel (0) target = $region17
    $region16: #{forward.5} parent=1 // pred_region
      _
    $region17: #{forward.5} parent=1 // pred_fallthru
      _
    // Predicated region
    $region18: #{forward.5} parent=1 // pred_check
      _
    $region19: #{forward.5} parent=1 // pred_check_branch
      %29 = sbr.rel (0) target = $region21
    $region20: #{forward.5} parent=1 // pred_region
      _
    $region21: #{forward.5} parent=1 // pred_fallthru
      _
    // Predicated region
    $region22: #{forward.5} parent=1 // pred_check
      _
    $region23: #{forward.5} parent=1 // pred_check_branch
      %31 = sbr.rel (0) target = $region25
    $region24: #{forward.5} parent=1 // pred_region
      _
    $region25: #{forward.5} parent=1 // pred_fallthru
      _
    // Predicated region
    $region26: #{forward.5} parent=1 // pred_check
      _
    $region27: #{forward.5} parent=1 // pred_check_branch
      %33 = sbr.rel (0) target = $region29
    $region28: #{forward.5} parent=1 // pred_region
      _
    $region29: #{forward.5} parent=1 // pred_fallthru
      _
    // Predicated region
    $region30: #{forward.5} parent=1 // pred_check
      _
    $region31: #{forward.5} parent=1 // pred_check_branch
      %35 = sbr.rel (0) target = $region33
    $region32: #{forward.5} parent=1 // pred_region
      _
    $region33: #{forward.5} parent=1 // pred_fallthru
      _
    // Predicated region
    $region34: #{forward.5} parent=1 // pred_check
      _
    $region35: #{forward.5} parent=1 // pred_check_branch
      %37 = sbr.rel (0) target = $region37
    $region36: #{forward.5} parent=1 // pred_region
      _
    $region37: #{forward.5} parent=1 // pred_fallthru
      _
    // Predicated region
    $region38: #{forward.5} parent=1 // pred_check
      _
    $region39: #{forward.5} parent=1 // pred_check_branch
      %39 = sbr.rel (0) target = $region41
    $region40: #{forward.5} parent=1 // pred_region
      _
    $region41: #{forward.5} parent=1 // pred_fallthru
      _
    // Predicated region
    $region42: #{forward.5} parent=1 // pred_check
      _
    $region43: #{forward.5} parent=1 // pred_check_branch
      %41 = sbr.rel (0) target = $region45
    $region44: #{forward.5} parent=1 // pred_region
      _
    $region45: #{forward.5} parent=1 // pred_fallthru
      _
    %v42 = vld [vmem:[%s0] sm:$0x3]
    %v43 = vld [vmem:[%s1] sm:$0xff]
    %v44 = vld [vmem:[%s1 + $0x8] sm:$0xff]
    %v45 = vld [vmem:[%s1 + $0x10] sm:$0xff]
    %v46 = vld [vmem:[%s1 + $0x18] sm:$0xff]
    %v47 = vld [vmem:[%s2] sm:$0x1]
    %v49 = vlaneseq
    %v50 = vshrl.u32 %v49, 7
    %v51 = vsub.s32 0, %v50
    %v52 = vrot.slane %v47, %v51
    %vm54 = vcmask 261120
    %v56 = vsel %vm54, %v42, 0
    %58 = vmatprep.subr.mxu0 0.0
    %59 = vmatpush1.msra.mxu0 %v43
    %60 = vmatprep.subr.mxu0 0.0
    %61 = vmatpush1.msra.mxu0 %v44
    %62 = vmatprep.subr.mxu0 0.0
    %63 = vmatpush1.msra.mxu0 %v45
    %64 = vmatprep.subr.mxu0 0.0
    %65 = vmatpush1.msra.mxu0 %v46
    %66 = vmatprep.subr.mxu0 0.0
    %67 = vmatpush1.msra.mxu0 0.0
    %68 = vmatprep.subr.mxu0 0.0
    %69 = vmatpush1.msra.mxu0 0.0
    %70 = vmatprep.subr.mxu0 0.0
    %71 = vmatpush1.msra.mxu0 0.0
    %72 = vmatprep.subr.mxu0 0.0
    %73 = vmatpush1.msra.mxu0 0.0
    %74 = vmatprep.subr.mxu0 0.0
    %75 = vmatpush1.msra.mxu0 0.0
    %76 = vmatprep.subr.mxu0 0.0
    %77 = vmatpush1.msra.mxu0 0.0
    %78 = vmatprep.subr.mxu0 0.0
    %79 = vmatpush1.msra.mxu0 0.0
    %80 = vmatprep.subr.mxu0 0.0
    %81 = vmatpush1.msra.mxu0 0.0
    %82 = vmatprep.subr.mxu0 0.0
    %83 = vmatpush1.msra.mxu0 0.0
    %84 = vmatprep.subr.mxu0 0.0
    %85 = vmatpush1.msra.mxu0 0.0
    %86 = vmatprep.subr.mxu0 0.0
    %87 = vmatpush1.msra.mxu0 0.0
    %88 = vmatprep.subr.mxu0 0.0
    %89 = vmatpush1.msra.mxu0 0.0
    %90 = vmatprep.subr.mxu0 0.0
    %91 = vmatpush1.msra.mxu0 0.0
    %92 = vmatprep.subr.mxu0 0.0
    %93 = vmatpush1.msra.mxu0 0.0
    %94 = vmatprep.subr.mxu0 0.0
    %95 = vmatpush1.msra.mxu0 0.0
    %96 = vmatprep.subr.mxu0 0.0
    %97 = vmatpush1.msra.mxu0 0.0
    %98 = vmatprep.subr.mxu0 0.0
    %99 = vmatpush1.msra.mxu0 0.0
    %100 = vmatprep.subr.mxu0 0.0
    %101 = vmatpush1.msra.mxu0 0.0
    %102 = vmatprep.subr.mxu0 0.0
    %103 = vmatpush1.msra.mxu0 0.0
    %104 = vmatprep.subr.mxu0 0.0
    %105 = vmatpush1.msra.mxu0 0.0
    %106 = vmatprep.subr.mxu0 0.0
    %107 = vmatpush1.msra.mxu0 0.0
    %108 = vmatprep.subr.mxu0 0.0
    %109 = vmatpush1.msra.mxu0 0.0
    %110 = vmatprep.subr.mxu0 0.0
    %111 = vmatpush1.msra.mxu0 0.0
    %112 = vmatprep.subr.mxu0 0.0
    %113 = vmatpush1.msra.mxu0 0.0
    %114 = vmatprep.subr.mxu0 0.0
    %115 = vmatpush1.msra.mxu0 0.0
    %116 = vmatprep.subr.mxu0 0.0
    %117 = vmatpush1.msra.mxu0 0.0
    %118 = vmatprep.subr.mxu0 0.0
    %119 = vmatpush1.msra.mxu0 0.0
    %120 = vmatprep.subr.mxu0 0.0
    %121 = vmatpush1.msra.mxu0 0.0
    %122 = vmatprep.mubr.f32.mxu0 0.0
    %123 = vmatmul.mubr.f32.gmra.mrb[0].mxu0 %v56
    %v124 = vpop.f32.mrb[0].mxu0
    %v125 = vadd.f32 %v52, %v124
    %v126 = vpop.f32.mrb[0].mxu0
    %127 = vdwg.mxu0
    %v128 = vmax.f32 %v125, 0.0
    %v129 = vld [vmem:[%s3] sm:$0x3]
    %v130 = vld [vmem:[%s4] sm:$0xff]
    %v131 = vld [vmem:[%s5] sm:$0x1]
    %v133 = vlaneseq
    %v134 = vshrl.u32 %v133, 7
    %v135 = vsub.s32 0, %v134
    %v136 = vrot.slane %v131, %v135
    %vm138 = vcmask 64512
    %v140 = vsel %vm138, %v129, 0
    %142 = vmatprep.subr.mxu0 0.0
    %143 = vmatpush1.msra.mxu0 %v130
    %144 = vmatprep.subr.mxu0 0.0
    %145 = vmatpush1.msra.mxu0 0.0
    %146 = vmatprep.subr.mxu0 0.0
    %147 = vmatpush1.msra.mxu0 0.0
    %148 = vmatprep.subr.mxu0 0.0
    %149 = vmatpush1.msra.mxu0 0.0
    %150 = vmatprep.subr.mxu0 0.0
    %151 = vmatpush1.msra.mxu0 0.0
    %152 = vmatprep.subr.mxu0 0.0
    %153 = vmatpush1.msra.mxu0 0.0
    %154 = vmatprep.subr.mxu0 0.0
    %155 = vmatpush1.msra.mxu0 0.0
    %156 = vmatprep.subr.mxu0 0.0
    %157 = vmatpush1.msra.mxu0 0.0
    %158 = vmatprep.subr.mxu0 0.0
    %159 = vmatpush1.msra.mxu0 0.0
    %160 = vmatprep.subr.mxu0 0.0
    %161 = vmatpush1.msra.mxu0 0.0
    %162 = vmatprep.subr.mxu0 0.0
    %163 = vmatpush1.msra.mxu0 0.0
    %164 = vmatprep.subr.mxu0 0.0
    %165 = vmatpush1.msra.mxu0 0.0
    %166 = vmatprep.subr.mxu0 0.0
    %167 = vmatpush1.msra.mxu0 0.0
    %168 = vmatprep.subr.mxu0 0.0
    %169 = vmatpush1.msra.mxu0 0.0
    %170 = vmatprep.subr.mxu0 0.0
    %171 = vmatpush1.msra.mxu0 0.0
    %172 = vmatprep.subr.mxu0 0.0
    %173 = vmatpush1.msra.mxu0 0.0
    %174 = vmatprep.subr.mxu0 0.0
    %175 = vmatpush1.msra.mxu0 0.0
    %176 = vmatprep.subr.mxu0 0.0
    %177 = vmatpush1.msra.mxu0 0.0
    %178 = vmatprep.subr.mxu0 0.0
    %179 = vmatpush1.msra.mxu0 0.0
    %180 = vmatprep.subr.mxu0 0.0
    %181 = vmatpush1.msra.mxu0 0.0
    %182 = vmatprep.subr.mxu0 0.0
    %183 = vmatpush1.msra.mxu0 0.0
    %184 = vmatprep.subr.mxu0 0.0
    %185 = vmatpush1.msra.mxu0 0.0
    %186 = vmatprep.subr.mxu0 0.0
    %187 = vmatpush1.msra.mxu0 0.0
    %188 = vmatprep.subr.mxu0 0.0
    %189 = vmatpush1.msra.mxu0 0.0
    %190 = vmatprep.subr.mxu0 0.0
    %191 = vmatpush1.msra.mxu0 0.0
    %192 = vmatprep.subr.mxu0 0.0
    %193 = vmatpush1.msra.mxu0 0.0
    %194 = vmatprep.subr.mxu0 0.0
    %195 = vmatpush1.msra.mxu0 0.0
    %196 = vmatprep.subr.mxu0 0.0
    %197 = vmatpush1.msra.mxu0 0.0
    %198 = vmatprep.subr.mxu0 0.0
    %199 = vmatpush1.msra.mxu0 0.0
    %200 = vmatprep.subr.mxu0 0.0
    %201 = vmatpush1.msra.mxu0 0.0
    %202 = vmatprep.subr.mxu0 0.0
    %203 = vmatpush1.msra.mxu0 0.0
    %204 = vmatprep.subr.mxu0 0.0
    %205 = vmatpush1.msra.mxu0 0.0
    %206 = vmatprep.mubr.f32.mxu0 0.0
    %207 = vmatmul.mubr.f32.gmra.mrb[0].mxu0 %v140
    %v208 = vpop.f32.mrb[0].mxu0
    %v209 = vadd.f32 %v136, %v208
    %v210 = vpop.f32.mrb[0].mxu0
    %211 = vdwg.mxu0
    %v212 = vmax.f32 %v209, 0.0
    %v213 = vld [vmem:[%s6] sm:$0xff]
    %v214 = vld [vmem:[%s6 + $0x8] sm:$0xf]
    %v215 = vld [vmem:[%s7] sm:$0x1]
    %v217 = vlaneseq
    %v218 = vshrl.u32 %v217, 7
    %v219 = vsub.s32 0, %v218
    %v220 = vrot.slane %v215, %v219
    %vm222 = vcmask 97280
    %v224 = vsel %vm222, %v212, 0
    %vm226 = vcmask 1043456
    %v228 = vsel %vm226, %v214, 0
    %230 = vmatprep.subr.mxu0 0.0
    %231 = vmatpush1.msra.mxu0 %v213
    %232 = vmatprep.subr.mxu0 0.0
    %233 = vmatpush1.msra.mxu0 %v228
    %234 = vmatprep.subr.mxu0 0.0
    %235 = vmatpush1.msra.mxu0 0.0
    %236 = vmatprep.subr.mxu0 0.0
    %237 = vmatpush1.msra.mxu0 0.0
    %238 = vmatprep.subr.mxu0 0.0
    %239 = vmatpush1.msra.mxu0 0.0
    %240 = vmatprep.subr.mxu0 0.0
    %241 = vmatpush1.msra.mxu0 0.0
    %242 = vmatprep.subr.mxu0 0.0
    %243 = vmatpush1.msra.mxu0 0.0
    %244 = vmatprep.subr.mxu0 0.0
    %245 = vmatpush1.msra.mxu0 0.0
    %246 = vmatprep.subr.mxu0 0.0
    %247 = vmatpush1.msra.mxu0 0.0
    %248 = vmatprep.subr.mxu0 0.0
    %249 = vmatpush1.msra.mxu0 0.0
    %250 = vmatprep.subr.mxu0 0.0
    %251 = vmatpush1.msra.mxu0 0.0
    %252 = vmatprep.subr.mxu0 0.0
    %253 = vmatpush1.msra.mxu0 0.0
    %254 = vmatprep.subr.mxu0 0.0
    %255 = vmatpush1.msra.mxu0 0.0
    %256 = vmatprep.subr.mxu0 0.0
    %257 = vmatpush1.msra.mxu0 0.0
    %258 = vmatprep.subr.mxu0 0.0
    %259 = vmatpush1.msra.mxu0 0.0
    %260 = vmatprep.subr.mxu0 0.0
    %261 = vmatpush1.msra.mxu0 0.0
    %262 = vmatprep.subr.mxu0 0.0
    %263 = vmatpush1.msra.mxu0 0.0
    %264 = vmatprep.subr.mxu0 0.0
    %265 = vmatpush1.msra.mxu0 0.0
    %266 = vmatprep.subr.mxu0 0.0
    %267 = vmatpush1.msra.mxu0 0.0
    %268 = vmatprep.subr.mxu0 0.0
    %269 = vmatpush1.msra.mxu0 0.0
    %270 = vmatprep.subr.mxu0 0.0
    %271 = vmatpush1.msra.mxu0 0.0
    %272 = vmatprep.subr.mxu0 0.0
    %273 = vmatpush1.msra.mxu0 0.0
    %274 = vmatprep.subr.mxu0 0.0
    %275 = vmatpush1.msra.mxu0 0.0
    %276 = vmatprep.subr.mxu0 0.0
    %277 = vmatpush1.msra.mxu0 0.0
    %278 = vmatprep.subr.mxu0 0.0
    %279 = vmatpush1.msra.mxu0 0.0
    %280 = vmatprep.subr.mxu0 0.0
    %281 = vmatpush1.msra.mxu0 0.0
    %282 = vmatprep.subr.mxu0 0.0
    %283 = vmatpush1.msra.mxu0 0.0
    %284 = vmatprep.subr.mxu0 0.0
    %285 = vmatpush1.msra.mxu0 0.0
    %286 = vmatprep.subr.mxu0 0.0
    %287 = vmatpush1.msra.mxu0 0.0
    %288 = vmatprep.subr.mxu0 0.0
    %289 = vmatpush1.msra.mxu0 0.0
    %290 = vmatprep.subr.mxu0 0.0
    %291 = vmatpush1.msra.mxu0 0.0
    %292 = vmatprep.subr.mxu0 0.0
    %293 = vmatpush1.msra.mxu0 0.0
    %294 = vmatprep.mubr.f32.mxu0 0.0
    %295 = vmatmul.mubr.f32.gmra.mrb[0].mxu0 %v224
    %v296 = vpop.f32.mrb[0].mxu0
    %v297 = vadd.f32 %v220, %v296
    %v298 = vpop.f32.mrb[0].mxu0
    %299 = vdwg.mxu0
    %v300 = vmax.f32 %v297, 0.0
    %v301 = vld [vmem:[%s8] sm:$0xff]
    %v302 = vld [vmem:[%s8 + $0x8] sm:$0xff]
    %v303 = vld [vmem:[%s9] sm:$0xff]
    %v304 = vld [vmem:[%s9 + $0x8] sm:$0xff]
    %vm305 = vcmask 130048
    %v307 = vsel %vm305, %v300, 0
    %309 = vmatprep.subr.mxu0 0.0
    %310 = vmatpush1.msra.mxu0 %v303
    %311 = vmatprep.subr.mxu0 0.0
    %312 = vmatpush1.msra.mxu0 %v304
    %313 = vmatprep.subr.mxu0 0.0
    %314 = vmatpush1.msra.mxu0 0.0
    %315 = vmatprep.subr.mxu0 0.0
    %316 = vmatpush1.msra.mxu0 0.0
    %317 = vmatprep.subr.mxu0 0.0
    %318 = vmatpush1.msra.mxu0 0.0
    %319 = vmatprep.subr.mxu0 0.0
    %320 = vmatpush1.msra.mxu0 0.0
    %321 = vmatprep.subr.mxu0 0.0
    %322 = vmatpush1.msra.mxu0 0.0
    %323 = vmatprep.subr.mxu0 0.0
    %324 = vmatpush1.msra.mxu0 0.0
    %325 = vmatprep.subr.mxu0 0.0
    %326 = vmatpush1.msra.mxu0 0.0
    %327 = vmatprep.subr.mxu0 0.0
    %328 = vmatpush1.msra.mxu0 0.0
    %329 = vmatprep.subr.mxu0 0.0
    %330 = vmatpush1.msra.mxu0 0.0
    %331 = vmatprep.subr.mxu0 0.0
    %332 = vmatpush1.msra.mxu0 0.0
    %333 = vmatprep.subr.mxu0 0.0
    %334 = vmatpush1.msra.mxu0 0.0
    %335 = vmatprep.subr.mxu0 0.0
    %336 = vmatpush1.msra.mxu0 0.0
    %337 = vmatprep.subr.mxu0 0.0
    %338 = vmatpush1.msra.mxu0 0.0
    %339 = vmatprep.subr.mxu0 0.0
    %340 = vmatpush1.msra.mxu0 0.0
    %341 = vmatprep.subr.mxu0 0.0
    %342 = vmatpush1.msra.mxu0 0.0
    %343 = vmatprep.subr.mxu0 0.0
    %344 = vmatpush1.msra.mxu0 0.0
    %345 = vmatprep.subr.mxu0 0.0
    %346 = vmatpush1.msra.mxu0 0.0
    %347 = vmatprep.subr.mxu0 0.0
    %348 = vmatpush1.msra.mxu0 0.0
    %349 = vmatprep.subr.mxu0 0.0
    %350 = vmatpush1.msra.mxu0 0.0
    %351 = vmatprep.subr.mxu0 0.0
    %352 = vmatpush1.msra.mxu0 0.0
    %353 = vmatprep.subr.mxu0 0.0
    %354 = vmatpush1.msra.mxu0 0.0
    %355 = vmatprep.subr.mxu0 0.0
    %356 = vmatpush1.msra.mxu0 0.0
    %357 = vmatprep.subr.mxu0 0.0
    %358 = vmatpush1.msra.mxu0 0.0
    %359 = vmatprep.subr.mxu0 0.0
    %360 = vmatpush1.msra.mxu0 0.0
    %361 = vmatprep.subr.mxu0 0.0
    %362 = vmatpush1.msra.mxu0 0.0
    %363 = vmatprep.subr.mxu0 0.0
    %364 = vmatpush1.msra.mxu0 0.0
    %365 = vmatprep.subr.mxu0 0.0
    %366 = vmatpush1.msra.mxu0 0.0
    %367 = vmatprep.subr.mxu0 0.0
    %368 = vmatpush1.msra.mxu0 0.0
    %369 = vmatprep.subr.mxu0 0.0
    %370 = vmatpush1.msra.mxu0 0.0
    %371 = vmatprep.subr.mxu0 0.0
    %372 = vmatpush1.msra.mxu0 0.0
    %373 = vmatprep.mubr.f32.mxu0 0.0
    %374 = vmatmul.mubr.f32.gmra.mrb[0].mxu0 %v307
    %v375 = vpop.f32.mrb[0].mxu0
    %v376 = vadd.f32 0.0, %v375
    %v377 = vpop.f32.mrb[0].mxu0
    %378 = vdwg.mxu0
    %v380 = vsel %vm305, %v128, 0
    %382 = vmatprep.subr.mxu0 0.0
    %383 = vmatpush1.msra.mxu0 %v301
    %384 = vmatprep.subr.mxu0 0.0
    %385 = vmatpush1.msra.mxu0 %v302
    %386 = vmatprep.subr.mxu0 0.0
    %387 = vmatpush1.msra.mxu0 0.0
    %388 = vmatprep.subr.mxu0 0.0
    %389 = vmatpush1.msra.mxu0 0.0
    %390 = vmatprep.subr.mxu0 0.0
    %391 = vmatpush1.msra.mxu0 0.0
    %392 = vmatprep.subr.mxu0 0.0
    %393 = vmatpush1.msra.mxu0 0.0
    %394 = vmatprep.subr.mxu0 0.0
    %395 = vmatpush1.msra.mxu0 0.0
    %396 = vmatprep.subr.mxu0 0.0
    %397 = vmatpush1.msra.mxu0 0.0
    %398 = vmatprep.subr.mxu0 0.0
    %399 = vmatpush1.msra.mxu0 0.0
    %400 = vmatprep.subr.mxu0 0.0
    %401 = vmatpush1.msra.mxu0 0.0
    %402 = vmatprep.subr.mxu0 0.0
    %403 = vmatpush1.msra.mxu0 0.0
    %404 = vmatprep.subr.mxu0 0.0
    %405 = vmatpush1.msra.mxu0 0.0
    %406 = vmatprep.subr.mxu0 0.0
    %407 = vmatpush1.msra.mxu0 0.0
    %408 = vmatprep.subr.mxu0 0.0
    %409 = vmatpush1.msra.mxu0 0.0
    %410 = vmatprep.subr.mxu0 0.0
    %411 = vmatpush1.msra.mxu0 0.0
    %412 = vmatprep.subr.mxu0 0.0
    %413 = vmatpush1.msra.mxu0 0.0
    %414 = vmatprep.subr.mxu0 0.0
    %415 = vmatpush1.msra.mxu0 0.0
    %416 = vmatprep.subr.mxu0 0.0
    %417 = vmatpush1.msra.mxu0 0.0
    %418 = vmatprep.subr.mxu0 0.0
    %419 = vmatpush1.msra.mxu0 0.0
    %420 = vmatprep.subr.mxu0 0.0
    %421 = vmatpush1.msra.mxu0 0.0
    %422 = vmatprep.subr.mxu0 0.0
    %423 = vmatpush1.msra.mxu0 0.0
    %424 = vmatprep.subr.mxu0 0.0
    %425 = vmatpush1.msra.mxu0 0.0
    %426 = vmatprep.subr.mxu0 0.0
    %427 = vmatpush1.msra.mxu0 0.0
    %428 = vmatprep.subr.mxu0 0.0
    %429 = vmatpush1.msra.mxu0 0.0
    %430 = vmatprep.subr.mxu0 0.0
    %431 = vmatpush1.msra.mxu0 0.0
    %432 = vmatprep.subr.mxu0 0.0
    %433 = vmatpush1.msra.mxu0 0.0
    %434 = vmatprep.subr.mxu0 0.0
    %435 = vmatpush1.msra.mxu0 0.0
    %436 = vmatprep.subr.mxu0 0.0
    %437 = vmatpush1.msra.mxu0 0.0
    %438 = vmatprep.subr.mxu0 0.0
    %439 = vmatpush1.msra.mxu0 0.0
    %440 = vmatprep.subr.mxu0 0.0
    %441 = vmatpush1.msra.mxu0 0.0
    %442 = vmatprep.subr.mxu0 0.0
    %443 = vmatpush1.msra.mxu0 0.0
    %444 = vmatprep.subr.mxu0 0.0
    %445 = vmatpush1.msra.mxu0 0.0
    %446 = vmatprep.mubr.f32.mxu0 0.0
    %447 = vmatmul.mubr.f32.gmra.mrb[0].mxu0 %v380
    %v448 = vpop.f32.mrb[0].mxu0
    %v449 = vadd.f32 %v376, %v448
    %v450 = vpop.f32.mrb[0].mxu0
    %451 = vdwg.mxu0
    %v452 = vld [vmem:[%s10] sm:$0x1]
    %v454 = vlaneseq
    %v455 = vshrl.u32 %v454, 7
    %v456 = vsub.s32 0, %v455
    %v457 = vrot.slane %v452, %v456
    %v459 = vadd.f32 %v449, %v457
    %v460 = vmax.f32 %v459, 0.0
    %vm461 = vcmask 33792
    %462 = vst.msk [vmem:[#allocation2] sm:$0x3] %vm461, %v460
    %v463 = vsel %vm461, %v460, -inf
    %464 = vmax.xlane.f32.xlu0 %v463
    %v465 = vpop.xlane.xlu0 %464
    %v466 = vsub.f32 %v460, %v465
    %v467 = vmul.f32 %v466, 1.442695
    %v468 = vpow.pop %v467
    %v469 = vsel %vm461, %v468, 0.0
    %470 = vadd.xlane.f32.xlu0 %v469
    %v471 = vpop.xlane.xlu0 %470
    %v472 = vrcp.pop %v471
    %v473 = vmul.f32 %v468, %v472
    %474 = vst.msk [vmem:[#allocation4] sm:$0x3] %vm461, %v473
    // Predicated region
    $region46: #{forward.5} parent=1 // pred_check
      _
    $region47: #{forward.5} parent=1 // pred_check_branch
      %476 = sbr.rel (0) target = $region49
    $region48: #{forward.5} parent=1 // pred_region
      %s478 = ssub.s32 32, 32
      %479 = vsyncadd [#allocation3], %s478
      %s481 = sshll.u32 [#allocation2], 4
      %s482 = int_to_ptr.vmem [resolvable:$true] %s481
      %484 = dma.vmem_to_hbm [thread:$0]  %s482, 32, %s11, [#allocation3]
    $region49: #{forward.5} parent=1 // pred_fallthru
      _
    // Predicated region
    $region50: #{forward.5} parent=1 // pred_check
      _
    $region51: #{forward.5} parent=1 // pred_check_branch
      %486 = sbr.rel (0) target = $region53
    $region52: #{forward.5} parent=1 // pred_region
      %s488 = ssub.s32 32, 32
      %489 = vsyncadd [#allocation5], %s488
      %s491 = sshll.u32 [#allocation4], 4
      %s492 = int_to_ptr.vmem [resolvable:$true] %s491
      %494 = dma.vmem_to_hbm [thread:$0]  %s492, 32, %s12, [#allocation5]
    $region53: #{forward.5} parent=1 // pred_fallthru
      _
    // Predicated region
    $region54: #{forward.5} parent=1 // pred_check
      _
    $region55: #{forward.5} parent=1 // pred_check_branch
      %496 = sbr.rel (0) target = $region57
    $region56: #{forward.5} parent=1 // pred_region
      %497 = dma.done [#allocation3], 32
    $region57: #{forward.5} parent=1 // pred_fallthru
      _
    // Predicated region
    $region58: #{forward.5} parent=1 // pred_check
      _
    $region59: #{forward.5} parent=1 // pred_check_branch
      %499 = sbr.rel (0) target = $region61
    $region60: #{forward.5} parent=1 // pred_region
      %500 = dma.done [#allocation5], 32
    $region61: #{forward.5} parent=1 // pred_fallthru
      _
    %501 = vsyncpa [#allocation3], 1
    %502 = vsyncpa [#allocation5], 1

</llo_original>
